<compile_context>
chip_gen: v6e
topology: v6e:2x2x1
jax: 0.10.0
libtpu: 0.0.40
codegen_flags: <defaults>
</compile_context>

<pallas_src>
import functools

import jax
import jax.numpy as jnp
from jax.experimental import pallas as pl
from jax.experimental.pallas import tpu as pltpu


def _round_up(x, m):
    return ((x + m - 1) // m) * m


@functools.lru_cache(maxsize=1)
def _vmem_limit_bytes():
    """Scoped-VMEM limit: ~3/4 of physical VMEM, capped at 96 MiB.
    v7x (64 MiB/TC) -> 48 MiB; v5e/v6e (128 MiB) -> 96 MiB.  Conservative default if the
    hardware query is unavailable."""
    cap = 64 * 1024 * 1024
    try:
        cap = int(pltpu.get_tpu_info().vmem_capacity_bytes)
    except Exception:
        pass
    return min((cap * 3) // 4, 96 * 1024 * 1024)


def _slab_bytes(strided_ok, pool, itemsize):
    """Per-buffer input tile budget (Pallas double-buffers input and output).
    Strided path steady state ~= 2*(slab + slab/pool) + ~2*slab/pool live values, so
    limit/5 leaves comfortable headroom (v7x ~9.6 MiB, v5e/v6e ~19 MiB).
    The reshape fallback may materialize a ~512/(itemsize*pool)-times lane-padded
    intermediate, so its slab is kept much smaller."""
    limit = _vmem_limit_bytes()
    if strided_ok:
        return max(2 * 1024 * 1024, limit // 5)
    blow = max(1, 512 // (int(itemsize) * pool))
    return max(256 * 1024, min(3 * 1024 * 1024, limit // (3 * blow)))


# ---------------------------------------------------------------------------
# Kernels
# ---------------------------------------------------------------------------
def _maxout_strided_kernel(x_ref, o_ref):
    """Primary: group max via stride-`pool` lane slices of the native-layout tile."""
    bf = o_ref.shape[-1]
    pool = x_ref.shape[-1] // bf
    acc = x_ref[:, pl.ds(0, bf, stride=pool)]
    for g in range(1, pool):
        acc = jnp.maximum(acc, x_ref[:, pl.ds(g, bf, stride=pool)])
    o_ref[...] = acc


def _maxout_reshape_kernel(x_ref, o_ref):
    """Fallback (previous, known-to-lower formulation): in-VMEM regroup + max over the
    trailing pool axis.  Same HBM traffic as the primary path, only the in-kernel
    relayout differs."""
    bb, bf = o_ref.shape
    pool = x_ref.shape[-1] // bf
    o_ref[...] = jnp.max(x_ref[...].reshape(bb, bf, pool), axis=-1)


@functools.lru_cache(maxsize=None)
def _strided_lowering_ok(dtype, pool):
    """Cached AOT Mosaic-compile probe per (dtype, pool): do stride-`pool` lane loads
    lower on this jaxlib?  Runs at trace time (plain Python), so the kernel choice is
    robust even when `maxout` is called inside an outer jax.jit."""
    try:
        sub = max(8, 32 // int(dtype.itemsize))
        f = pl.pallas_call(
            _maxout_strided_kernel,
            out_shape=jax.ShapeDtypeStruct((sub, 128), dtype),
            grid=(1, 1),
            in_specs=[pl.BlockSpec((sub, 128 * pool), lambda i, j: (i, j))],
            out_specs=pl.BlockSpec((sub, 128), lambda i, j: (i, j)),
        )
        jax.jit(f).lower(jax.ShapeDtypeStruct((sub, 128 * pool), dtype)).compile()
        return True
    except Exception:
        return False


# ---------------------------------------------------------------------------
# Tiling / layout selection
# ---------------------------------------------------------------------------
def _flatten_lanes(B, Fp, pool, sub):
    """For Fp < 128: reinterpret the flat array as (rows, W) output / (rows, W*pool)
    input with W a multiple of 128 (free row-major reshape).  Groups are contiguous
    runs of `pool` elements, so any W multiple of 128 dividing B*Fp keeps every group
    inside one row.  Returns W, or None if no such W exists."""
    total = B * Fp
    if total <= 0 or total % 128 != 0:
        return None
    best, best_key = None, None
    for w in range(128, min(total, 8192) + 1, 128):
        if total % w == 0:
            key = ((total // w) % sub == 0, w)   # prefer no sublane padding, then wider rows
            if best_key is None or key > best_key:
                best, best_key = w, key
    return best


def _pick_blocks(B, Fp, pool, itemsize, slab_bytes):
    """Choose (block_b, block_fp) from a VMEM byte budget.
    - block_fp: multiple of 128 that minimizes Fp-axis tail padding (ties -> larger).
    - block_b:  fills the rest of the slab, rounded to the packed-sublane multiple.
    - guarantees >=2 grid steps (and nudges toward an even count) so both v7x
      TensorCores get balanced work."""
    itemsize = int(itemsize)
    sub = max(8, 32 // itemsize)          # packed sublanes: f32 -> 8, bf16 -> 16, int8 -> 32

    if Fp < 128:
        block_fp = Fp                     # only when lane-flattening was impossible
    else:
        budget_fp = max(128, (slab_bytes // (sub * pool * itemsize)) // 128 * 128)
        max_fp = min(_round_up(Fp, 128), budget_fp, 4096)
        best, best_key = 128, None
        for c in range(128, max_fp + 1, 128):
            key = (pl.cdiv(Fp, c) * c - Fp, -c)   # (tail padding, prefer larger tile)
            if best_key is None or key < best_key:
                best, best_key = c, key
        block_fp = best

    row_bytes = block_fp * pool * itemsize
    block_b = max(sub, (slab_bytes // row_bytes) // sub * sub)
    block_b = min(block_b, _round_up(B, sub)) if B >= sub else B

    nb, nf = pl.cdiv(B, block_b), pl.cdiv(Fp, block_fp)
    total = nb * nf
    if total == 1 and B > sub:
        block_b = _round_up(pl.cdiv(B, 2), sub)               # give the 2nd TC a step
    elif total % 2 == 1 and total < 8 and nf % 2 == 1 and B > (nb + 1) * sub:
        block_b = _round_up(pl.cdiv(B, nb + 1), sub)          # avoid a straggler step
    return block_b, block_fp


# ---------------------------------------------------------------------------
# pallas_call builder
# ---------------------------------------------------------------------------
def _maxout_call(x2, pool, block_b, block_fp, kernel):
    B, F = x2.shape
    Fp = F // pool
    itemsize = x2.dtype.itemsize
    nb, nf = pl.cdiv(B, block_b), pl.cdiv(Fp, block_fp)
    # Put the grid axis with more steps first (v7x megacore splits the leading
    # parallel axis); index maps return (batch_block, feature_block) either way.
    if nf > nb:
        grid = (nf, nb)
        imap = lambda f, b: (b, f)
    else:
        grid = (nb, nf)
        imap = lambda b, f: (b, f)
    cost = pl.CostEstimate(
        flops=B * F,                                  # ~one max-compare per input element
        transcendentals=0,
        bytes_accessed=(B * F + B * Fp) * itemsize,   # 1 read + 1/pool write
    )
    return pl.pallas_call(
        kernel,
        out_shape=jax.ShapeDtypeStruct((B, Fp), x2.dtype),
        grid=grid,
        in_specs=[pl.BlockSpec((block_b, block_fp * pool), imap)],
        out_specs=pl.BlockSpec((block_b, block_fp), imap),
        compiler_params=pltpu.CompilerParams(
            dimension_semantics=("parallel", "parallel"),
            vmem_limit_bytes=_vmem_limit_bytes(),
        ),
        cost_estimate=cost,
    )(x2)


# ---------------------------------------------------------------------------
# Public wrapper (matches the PyTorch module's forward).
# ---------------------------------------------------------------------------
def maxout(x, pool_size):
    """Maxout over the last dim: (..., F) -> (..., F // pool_size)."""
    F = x.shape[-1]
    if F % pool_size != 0:
        raise ValueError(f"Wrong input last dim size ({F}) for Maxout({pool_size})")
    if pool_size == 1:
        return x
    pool = int(pool_size)
    Fp = F // pool
    lead = x.shape[:-1]
    B = 1
    for d in lead:
        B *= int(d)

    itemsize = x.dtype.itemsize
    sub = max(8, 32 // int(itemsize))
    strided_ok = _strided_lowering_ok(x.dtype, pool)
    kernel = _maxout_strided_kernel if strided_ok else _maxout_reshape_kernel
    slab = _slab_bytes(strided_ok, pool, itemsize)

    # Lane-dense reinterpretation for narrow outputs (Fp < 128): a free row-major
    # reshape, no extra HBM traffic, full-lane output stores.
    Bk, Fpk = B, Fp
    if Fp < 128:
        W = _flatten_lanes(B, Fp, pool, sub)
        if W is not None:
            Bk, Fpk = (B * Fp) // W, W

    x2 = x.reshape(Bk, Fpk * pool)
    block_b, block_fp = _pick_blocks(Bk, Fpk, pool, itemsize, slab)
    out = _maxout_call(x2, pool, block_b, block_fp, kernel)
    return out.reshape(*lead, Fp)


if __name__ == "__main__":
    key = jax.random.PRNGKey(0)
    k1, k2 = jax.random.split(key)

    # Case 1: 2-D activations, f32, lane-dense output (Fp = 128), multi-step batch grid.
    B, F, pool = 16, 512, 4
    x1 = jax.random.normal(k1, (B, F), dtype=jnp.float32)
    y1 = maxout(x1, pool)
    jax.block_until_ready(y1)
    ref1 = jnp.max(x1.reshape(B, F // pool, pool), axis=-1)
    assert y1.shape == (B, F // pool), y1.shape
    assert y1.dtype == x1.dtype
    assert jnp.allclose(y1, ref1), "Pallas Maxout mismatch vs reference (case 1)"

    # Case 2: N-D input, bf16, pool=3, Fp=32 (< 128) -> exercises the lane-dense
    # flattened path (output rows become full 128-lane multiples).
    shp, pool2 = (4, 8, 96), 3
    x2 = jax.random.normal(k2, shp, dtype=jnp.bfloat16)
    y2 = maxout(x2, pool2)
    jax.block_until_ready(y2)
    ref2 = jnp.max(x2.reshape(4, 8, 96 // pool2, pool2), axis=-1)
    assert y2.shape == (4, 8, 96 // pool2), y2.shape
    assert y2.dtype == x2.dtype
    assert jnp.array_equal(y2, ref2), "Pallas Maxout mismatch vs reference (case 2)"

    print("KERNEL_OK")
</pallas_src>

<mosaic_0001>
module attributes {stable_mosaic.version = 11 : i64} {
  func.func @_maxout_reshape_kernel(%arg0: i32, %arg1: i32, %arg2: memref<8x512xf32, #tpu.memory_space<vmem>>, %arg3: memref<8x128xf32, #tpu.memory_space<vmem>>) attributes {dimension_semantics = [#tpu.dimension_semantics<parallel>, #tpu.dimension_semantics<parallel>], iteration_bounds = array<i64: 2, 1>, scalar_prefetch = 0 : i64, scratch_operands = 0 : i64, tpu.core_type = #tpu.core_type<tc>, window_params = [{transform_indices = @transform_0, window_bounds = array<i64: 8, 512>}, {transform_indices = @transform_1, window_bounds = array<i64: 8, 128>}]} {
    %c0 = arith.constant 0 : index
    %c0_0 = arith.constant 0 : index
    %0 = vector.load %arg2[%c0, %c0_0] : memref<8x512xf32, #tpu.memory_space<vmem>>, vector<8x512xf32>
    %1 = vector.shape_cast %0 : vector<8x512xf32> to vector<8x128x4xf32>
    %cst = arith.constant dense<0xFF800000> : vector<8x128xf32>
    %2 = vector.multi_reduction <maximumf>, %1, %cst [2] : vector<8x128x4xf32> to vector<8x128xf32>
    %c0_1 = arith.constant 0 : index
    %c0_2 = arith.constant 0 : index
    %3 = vector.load %arg3[%c0_1, %c0_2] : memref<8x128xf32, #tpu.memory_space<vmem>>, vector<8x128xf32>
    tpu.vector_store %arg3[%c0_1, %c0_2], %2 {strides = array<i32>} : memref<8x128xf32, #tpu.memory_space<vmem>>, vector<8x128xf32>,
    return
  }
  func.func @transform_0(%arg0: i32, %arg1: i32) -> (i32, i32) {
    %c0_i32 = arith.constant 0 : i32
    return %arg0, %arg1 : i32, i32
  }
  func.func @transform_1(%arg0: i32, %arg1: i32) -> (i32, i32) {
    %c0_i32 = arith.constant 0 : i32
    return %arg0, %arg1 : i32, i32
  }
}

</mosaic_0001>

<llo_original>
// kernel: tpu_custom_call.1
$region0: #{tpu_custom_call.1}
  #allocation0 [shape = 'u32[]', space=smem, size = 0x4, offset = 0x4, fixed_abs, tag = 'smem constant byte address 0x4 - core index']
  #allocation1 [shape = 'u32[144,128]{1,0:T(1,128)}', space=vmem, size = 0x12000, scoped, tag = 'internal scratch']
  %s0 = inlined_call_operand.hbm [shape: f32[16,512], index: 0, kind: input, shape index: {}]
  %s1 = inlined_call_operand.hbm [shape: f32[16,128], index: 1, kind: output, shape index: {}]
  %s2 = sld [smem:[#allocation0]]
  $region41: #{tpu_custom_call.1} parent=0
    _
  %s4 = ssub.s32 1, %s2
  %s5 = scalar_select 0, %s4, %s2
  $region1: #{tpu_custom_call.1} parent=0
    #allocation2 [shape = 'u8[32768]{0}', space=vmem, size = 0x8000, scoped, tag = 'input window, operand 0']
    #allocation3 [shape = 's32[2]{0}', space=sflag, size = 0x8, scoped, tag = 'scoped memory for tpu_custom_call.1']
    #allocation4 [shape = 's32[2]{0}', space=sflag, size = 0x8, scoped, tag = 'scoped memory for tpu_custom_call.1']
    #allocation5 [shape = 'u8[8192]{0}', space=vmem, size = 0x2000, scoped, tag = 'output window, operand 0']
    %6 = vsyncpa [#allocation3], 0
    %s7 = scalar_lea.sflag [#allocation3], 1
    %8 = vsyncpa %s7, 0
    %9 = vsyncpa [#allocation4], 0
    %s10 = scalar_lea.sflag [#allocation4], 1
    %11 = vsyncpa %s10, 0
    loop: start=0, step=1, limit=4
    $region2: #{tpu_custom_call.1} parent=1 // loop_pre_header
      _
    $region3: #{tpu_custom_call.1} parent=1 // loop_header
      %s13 = sphi 0, %s17
      %p14 = scmp.ge.s32.totalorder %s13, 4
      %s20 = sphi 0, %s32
      %s21 = sphi 0, %s28
      %s22 = sphi 0, %s20
      %s23 = sphi 0, %s21
      %s24 = sphi 0, %s22
      %s25 = sphi 0, %s23
      %s37 = sphi 0, %s39
      %s40 = sphi 0, %s37
      %s41 = sphi 0, %s40
      %s57 = sphi 0, %s41
      %s65 = sphi 0, %s67
      %s68 = sphi 0, %s65
      %s69 = sphi 0, %s68
      %s85 = sphi 0, %s69
    $region4: #{tpu_custom_call.1} parent=1 // loop_header_branch
      %16 = sbr.rel (%p14) target = $region8
    $region5: #{tpu_custom_call.1} parent=1 // loop_body
      %s18 = ssub.s32 %s13, 1
      %s19 = ssub.s32 %s13, 2
      %s26 = sadd.s32 1, %s21
      %p27 = scmp.ge.s32.totalorder %s26, 1
      %s28 = scalar_select %p27, 0, %s26
      %s29 = sadd.s32 1, %s20
      %s30 = scalar_select %p27, %s29, %s20
      %p31 = scmp.ge.s32.totalorder %s30, 2
      %s32 = scalar_select %p31, 0, %s30
      %s33 = ssub.s32 %s20, %s32
      %s34 = ssub.s32 %s21, %s28
      %s35 = sor.u32 %s33, %s34
      %p36 = scmp.eq.s32.totalorder %s35, 0
      %s38 = sadd.s32 %s37, 1
      %s39 = scalar_select %p36, %s37, %s38
      %p42 = pneg %p36
      %p43 = scmp.eq.s32.totalorder %s13, 1
      %p44 = por %p42, %p43
      %p45 = scmp.ne.s32.totalorder %s37, %s40
      %p46 = scmp.eq.s32.totalorder %s13, 0
      %p47 = por %p45, %p46
      %p48 = scmp.ne.s32.totalorder %s37, %s40
      %p49 = scmp.eq.s32.totalorder %s18, 1
      %p50 = por %p48, %p49
      %p51 = scmp.ne.s32.totalorder %s40, %s41
      %p52 = scmp.eq.s32.totalorder %s18, 0
      %p53 = por %p51, %p52
      %p54 = scmp.ne.s32.totalorder %s40, %s41
      %p55 = scmp.eq.s32.totalorder %s19, 1
      %p56 = por %p54, %p55
      %p58 = scmp.ne.s32.totalorder %s41, %s57
      %p59 = scmp.eq.s32.totalorder %s19, 0
      %p60 = por %p58, %p59
      %s61 = ssub.s32 %s20, %s32
      %s62 = ssub.s32 %s21, %s28
      %s63 = sor.u32 %s61, %s62
      %p64 = scmp.eq.s32.totalorder %s63, 0
      %s66 = sadd.s32 %s65, 1
      %s67 = scalar_select %p64, %s65, %s66
      %p70 = pneg %p64
      %p71 = scmp.eq.s32.totalorder %s13, 1
      %p72 = por %p70, %p71
      %p73 = scmp.ne.s32.totalorder %s65, %s68
      %p74 = scmp.eq.s32.totalorder %s13, 0
      %p75 = por %p73, %p74
      %p76 = scmp.ne.s32.totalorder %s65, %s68
      %p77 = scmp.eq.s32.totalorder %s18, 1
      %p78 = por %p76, %p77
      %p79 = scmp.ne.s32.totalorder %s68, %s69
      %p80 = scmp.eq.s32.totalorder %s18, 0
      %p81 = por %p79, %p80
      %p82 = scmp.ne.s32.totalorder %s68, %s69
      %p83 = scmp.eq.s32.totalorder %s19, 1
      %p84 = por %p82, %p83
      %p86 = scmp.ne.s32.totalorder %s69, %s85
      %p87 = scmp.eq.s32.totalorder %s19, 0
      %p88 = por %p86, %p87
      %p89 = scmp.le.s32.totalorder 1, %s13
      %p90 = scmp.lt.s32.totalorder %s13, 3
      %p91 = pnand %p89, %p90
      %p92 = pneg %p91
      // Predicated region
      $region9: #{tpu_custom_call.1} parent=5 // pred_check
        _
      $region10: #{tpu_custom_call.1} parent=5 // pred_check_branch
        %94 = sbr.rel (%p91) target = $region12
      $region11: #{tpu_custom_call.1} parent=5 // pred_region
        %s95 = ssub.s32 %s13, 1
      $region12: #{tpu_custom_call.1} parent=5 // pred_fallthru
        _
      %p96 = scmp.lt.s32.totalorder %s13, 2
      // Predicated region
      $region13: #{tpu_custom_call.1} parent=5 // pred_check
        %p97 = pneg %p96
      $region14: #{tpu_custom_call.1} parent=5 // pred_check_branch
        %99 = sbr.rel (%p97) target = $region16
      $region15: #{tpu_custom_call.1} parent=5 // pred_region
        // Predicated region
        $region17: #{tpu_custom_call.1} parent=15 // pred_check
          %p100 = pneg %p47
        $region18: #{tpu_custom_call.1} parent=15 // pred_check_branch
          %102 = sbr.rel (%p100) target = $region20
        $region19: #{tpu_custom_call.1} parent=15 // pred_region
          %s103 = sand.u32 %s37, 1
          %s104 = scalar_lea.sflag [#allocation3], %s103
          %s105 = sand.u32 %s37, 1
          %s106 = smul.addr %s105, 32
          %s107 = scalar_lea.vmem [#allocation2], %s106
          %s108 = smul.u32 4, %s21
          %s110 = ssub.s32 512, 512
          %111 = vsyncadd %s104, %s110
          %s112 = smul.addr %s20, 4
          %s113 = sadd.s32 %s108, %s112
          %s114 = smul.addr %s113, 128
          %s115 = scalar_lea.hbm %s0, %s114
          %s117 = sshll.u32 %s107, 4
          %s118 = int_to_ptr.vmem [resolvable:$true] %s117
          %120 = dma.hbm_to_vmem [thread:$0]  %s115, 512, %s118, %s104
        $region20: #{tpu_custom_call.1} parent=15 // pred_fallthru
          _
      $region16: #{tpu_custom_call.1} parent=5 // pred_fallthru
        _
      %p121 = scmp.le.s32.totalorder 1, %s13
      %p122 = scmp.lt.s32.totalorder %s13, 3
      %p123 = pnand %p121, %p122
      %p124 = pneg %p123
      // Predicated region
      $region21: #{tpu_custom_call.1} parent=5 // pred_check
        _
      $region22: #{tpu_custom_call.1} parent=5 // pred_check_branch
        %126 = sbr.rel (%p123) target = $region24
      $region23: #{tpu_custom_call.1} parent=5 // pred_region
        %s127 = ssub.s32 %s13, 1
        %s128 = sand.u32 %s40, 1
        %s129 = scalar_lea.sflag [#allocation3], %s128
        %s130 = sand.u32 %s40, 1
        %s131 = smul.addr %s130, 32
        %s132 = scalar_lea.vmem [#allocation2], %s131
        // Predicated region
        $region25: #{tpu_custom_call.1} parent=23 // pred_check
          %p133 = pneg %p53
        $region26: #{tpu_custom_call.1} parent=23 // pred_check_branch
          %135 = sbr.rel (%p133) target = $region28
        $region27: #{tpu_custom_call.1} parent=23 // pred_region
          %136 = dma.done %s129, 512
        $region28: #{tpu_custom_call.1} parent=23 // pred_fallthru
          _
        %s137 = sand.u32 %s40, 1
        %s138 = scalar_lea.sflag [#allocation3], %s137
        %s139 = sand.u32 %s40, 1
        %s140 = smul.addr %s139, 32
        %s141 = scalar_lea.vmem [#allocation2], %s140
        %p142 = pneg %p53
        %p143 = pneg %p50
        %p144 = pneg %p81
        %p145 = pneg %p78
        %s146 = sand.u32 %s68, 1
        %s147 = scalar_lea.sflag [#allocation4], %s146
        %s148 = sand.u32 %s68, 1
        %s149 = smul.addr %s148, 8
        %s150 = scalar_lea.vmem [#allocation5], %s149
        %s151 = smul.u32 4, %s23
        %v152 = vld [vmem:[%s132] sm:$0xff]
        %v153 = vld [vmem:[%s132 + $0x8] sm:$0xff]
        %v154 = vld [vmem:[%s132 + $0x10] sm:$0xff]
        %v155 = vld [vmem:[%s132 + $0x18] sm:$0xff]
        %157 = vrot.lane.b32.xlu0 %v152, 124
        %v158 = vpop.permute.xlu0 %157
        %160 = vrot.lane.b32.xlu0 %v152, 120
        %v161 = vpop.permute.xlu0 %160
        %163 = vrot.lane.b32.xlu0 %v152, 116
        %v164 = vpop.permute.xlu0 %163
        %166 = vrot.lane.b32.xlu0 %v152, 112
        %v167 = vpop.permute.xlu0 %166
        %169 = vrot.lane.b32.xlu0 %v152, 108
        %v170 = vpop.permute.xlu0 %169
        %172 = vrot.lane.b32.xlu0 %v152, 104
        %v173 = vpop.permute.xlu0 %172
        %175 = vrot.lane.b32.xlu0 %v152, 100
        %v176 = vpop.permute.xlu0 %175
        %178 = vrot.lane.b32.xlu0 %v152, 96
        %v179 = vpop.permute.xlu0 %178
        %181 = vrot.lane.b32.xlu0 %v152, 92
        %v182 = vpop.permute.xlu0 %181
        %184 = vrot.lane.b32.xlu0 %v152, 88
        %v185 = vpop.permute.xlu0 %184
        %187 = vrot.lane.b32.xlu0 %v152, 84
        %v188 = vpop.permute.xlu0 %187
        %190 = vrot.lane.b32.xlu0 %v152, 80
        %v191 = vpop.permute.xlu0 %190
        %193 = vrot.lane.b32.xlu0 %v152, 76
        %v194 = vpop.permute.xlu0 %193
        %196 = vrot.lane.b32.xlu0 %v152, 72
        %v197 = vpop.permute.xlu0 %196
        %199 = vrot.lane.b32.xlu0 %v152, 68
        %v200 = vpop.permute.xlu0 %199
        %202 = vrot.lane.b32.xlu0 %v152, 64
        %v203 = vpop.permute.xlu0 %202
        %205 = vrot.lane.b32.xlu0 %v152, 60
        %v206 = vpop.permute.xlu0 %205
        %208 = vrot.lane.b32.xlu0 %v152, 56
        %v209 = vpop.permute.xlu0 %208
        %211 = vrot.lane.b32.xlu0 %v152, 52
        %v212 = vpop.permute.xlu0 %211
        %214 = vrot.lane.b32.xlu0 %v152, 48
        %v215 = vpop.permute.xlu0 %214
        %217 = vrot.lane.b32.xlu0 %v152, 44
        %v218 = vpop.permute.xlu0 %217
        %220 = vrot.lane.b32.xlu0 %v152, 40
        %v221 = vpop.permute.xlu0 %220
        %223 = vrot.lane.b32.xlu0 %v152, 36
        %v224 = vpop.permute.xlu0 %223
        %226 = vrot.lane.b32.xlu0 %v152, 32
        %v227 = vpop.permute.xlu0 %226
        %229 = vrot.lane.b32.xlu0 %v152, 28
        %v230 = vpop.permute.xlu0 %229
        %232 = vrot.lane.b32.xlu0 %v152, 24
        %v233 = vpop.permute.xlu0 %232
        %235 = vrot.lane.b32.xlu0 %v152, 20
        %v236 = vpop.permute.xlu0 %235
        %238 = vrot.lane.b32.xlu0 %v152, 16
        %v239 = vpop.permute.xlu0 %238
        %241 = vrot.lane.b32.xlu0 %v152, 12
        %v242 = vpop.permute.xlu0 %241
        %244 = vrot.lane.b32.xlu0 %v152, 8
        %v245 = vpop.permute.xlu0 %244
        %247 = vrot.lane.b32.xlu0 %v152, 4
        %v248 = vpop.permute.xlu0 %247
        %251 = vrot.lane.b32.xlu0 %v153, 124
        %v252 = vpop.permute.xlu0 %251
        %254 = vrot.lane.b32.xlu0 %v153, 120
        %v255 = vpop.permute.xlu0 %254
        %257 = vrot.lane.b32.xlu0 %v153, 116
        %v258 = vpop.permute.xlu0 %257
        %260 = vrot.lane.b32.xlu0 %v153, 112
        %v261 = vpop.permute.xlu0 %260
        %263 = vrot.lane.b32.xlu0 %v153, 108
        %v264 = vpop.permute.xlu0 %263
        %266 = vrot.lane.b32.xlu0 %v153, 104
        %v267 = vpop.permute.xlu0 %266
        %269 = vrot.lane.b32.xlu0 %v153, 100
        %v270 = vpop.permute.xlu0 %269
        %272 = vrot.lane.b32.xlu0 %v153, 96
        %v273 = vpop.permute.xlu0 %272
        %275 = vrot.lane.b32.xlu0 %v153, 92
        %v276 = vpop.permute.xlu0 %275
        %278 = vrot.lane.b32.xlu0 %v153, 88
        %v279 = vpop.permute.xlu0 %278
        %281 = vrot.lane.b32.xlu0 %v153, 84
        %v282 = vpop.permute.xlu0 %281
        %284 = vrot.lane.b32.xlu0 %v153, 80
        %v285 = vpop.permute.xlu0 %284
        %287 = vrot.lane.b32.xlu0 %v153, 76
        %v288 = vpop.permute.xlu0 %287
        %290 = vrot.lane.b32.xlu0 %v153, 72
        %v291 = vpop.permute.xlu0 %290
        %293 = vrot.lane.b32.xlu0 %v153, 68
        %v294 = vpop.permute.xlu0 %293
        %296 = vrot.lane.b32.xlu0 %v153, 64
        %v297 = vpop.permute.xlu0 %296
        %299 = vrot.lane.b32.xlu0 %v153, 60
        %v300 = vpop.permute.xlu0 %299
        %302 = vrot.lane.b32.xlu0 %v153, 56
        %v303 = vpop.permute.xlu0 %302
        %305 = vrot.lane.b32.xlu0 %v153, 52
        %v306 = vpop.permute.xlu0 %305
        %308 = vrot.lane.b32.xlu0 %v153, 48
        %v309 = vpop.permute.xlu0 %308
        %311 = vrot.lane.b32.xlu0 %v153, 44
        %v312 = vpop.permute.xlu0 %311
        %314 = vrot.lane.b32.xlu0 %v153, 40
        %v315 = vpop.permute.xlu0 %314
        %317 = vrot.lane.b32.xlu0 %v153, 36
        %v318 = vpop.permute.xlu0 %317
        %320 = vrot.lane.b32.xlu0 %v153, 32
        %v321 = vpop.permute.xlu0 %320
        %323 = vrot.lane.b32.xlu0 %v153, 28
        %v324 = vpop.permute.xlu0 %323
        %326 = vrot.lane.b32.xlu0 %v153, 24
        %v327 = vpop.permute.xlu0 %326
        %329 = vrot.lane.b32.xlu0 %v153, 20
        %v330 = vpop.permute.xlu0 %329
        %332 = vrot.lane.b32.xlu0 %v153, 16
        %v333 = vpop.permute.xlu0 %332
        %335 = vrot.lane.b32.xlu0 %v153, 12
        %v336 = vpop.permute.xlu0 %335
        %338 = vrot.lane.b32.xlu0 %v153, 8
        %v339 = vpop.permute.xlu0 %338
        %341 = vrot.lane.b32.xlu0 %v153, 4
        %v342 = vpop.permute.xlu0 %341
        %345 = vrot.lane.b32.xlu0 %v154, 124
        %v346 = vpop.permute.xlu0 %345
        %348 = vrot.lane.b32.xlu0 %v154, 120
        %v349 = vpop.permute.xlu0 %348
        %351 = vrot.lane.b32.xlu0 %v154, 116
        %v352 = vpop.permute.xlu0 %351
        %354 = vrot.lane.b32.xlu0 %v154, 112
        %v355 = vpop.permute.xlu0 %354
        %357 = vrot.lane.b32.xlu0 %v154, 108
        %v358 = vpop.permute.xlu0 %357
        %360 = vrot.lane.b32.xlu0 %v154, 104
        %v361 = vpop.permute.xlu0 %360
        %363 = vrot.lane.b32.xlu0 %v154, 100
        %v364 = vpop.permute.xlu0 %363
        %366 = vrot.lane.b32.xlu0 %v154, 96
        %v367 = vpop.permute.xlu0 %366
        %369 = vrot.lane.b32.xlu0 %v154, 92
        %v370 = vpop.permute.xlu0 %369
        %372 = vrot.lane.b32.xlu0 %v154, 88
        %v373 = vpop.permute.xlu0 %372
        %375 = vrot.lane.b32.xlu0 %v154, 84
        %v376 = vpop.permute.xlu0 %375
        %378 = vrot.lane.b32.xlu0 %v154, 80
        %v379 = vpop.permute.xlu0 %378
        %381 = vrot.lane.b32.xlu0 %v154, 76
        %v382 = vpop.permute.xlu0 %381
        %384 = vrot.lane.b32.xlu0 %v154, 72
        %v385 = vpop.permute.xlu0 %384
        %387 = vrot.lane.b32.xlu0 %v154, 68
        %v388 = vpop.permute.xlu0 %387
        %390 = vrot.lane.b32.xlu0 %v154, 64
        %v391 = vpop.permute.xlu0 %390
        %393 = vrot.lane.b32.xlu0 %v154, 60
        %v394 = vpop.permute.xlu0 %393
        %396 = vrot.lane.b32.xlu0 %v154, 56
        %v397 = vpop.permute.xlu0 %396
        %399 = vrot.lane.b32.xlu0 %v154, 52
        %v400 = vpop.permute.xlu0 %399
        %402 = vrot.lane.b32.xlu0 %v154, 48
        %v403 = vpop.permute.xlu0 %402
        %405 = vrot.lane.b32.xlu0 %v154, 44
        %v406 = vpop.permute.xlu0 %405
        %408 = vrot.lane.b32.xlu0 %v154, 40
        %v409 = vpop.permute.xlu0 %408
        %411 = vrot.lane.b32.xlu0 %v154, 36
        %v412 = vpop.permute.xlu0 %411
        %414 = vrot.lane.b32.xlu0 %v154, 32
        %v415 = vpop.permute.xlu0 %414
        %417 = vrot.lane.b32.xlu0 %v154, 28
        %v418 = vpop.permute.xlu0 %417
        %420 = vrot.lane.b32.xlu0 %v154, 24
        %v421 = vpop.permute.xlu0 %420
        %423 = vrot.lane.b32.xlu0 %v154, 20
        %v424 = vpop.permute.xlu0 %423
        %426 = vrot.lane.b32.xlu0 %v154, 16
        %v427 = vpop.permute.xlu0 %426
        %429 = vrot.lane.b32.xlu0 %v154, 12
        %v430 = vpop.permute.xlu0 %429
        %432 = vrot.lane.b32.xlu0 %v154, 8
        %v433 = vpop.permute.xlu0 %432
        %435 = vrot.lane.b32.xlu0 %v154, 4
        %v436 = vpop.permute.xlu0 %435
        %439 = vrot.lane.b32.xlu0 %v155, 124
        %v440 = vpop.permute.xlu0 %439
        %442 = vrot.lane.b32.xlu0 %v155, 120
        %v443 = vpop.permute.xlu0 %442
        %445 = vrot.lane.b32.xlu0 %v155, 116
        %v446 = vpop.permute.xlu0 %445
        %448 = vrot.lane.b32.xlu0 %v155, 112
        %v449 = vpop.permute.xlu0 %448
        %451 = vrot.lane.b32.xlu0 %v155, 108
        %v452 = vpop.permute.xlu0 %451
        %454 = vrot.lane.b32.xlu0 %v155, 104
        %v455 = vpop.permute.xlu0 %454
        %457 = vrot.lane.b32.xlu0 %v155, 100
        %v458 = vpop.permute.xlu0 %457
        %460 = vrot.lane.b32.xlu0 %v155, 96
        %v461 = vpop.permute.xlu0 %460
        %463 = vrot.lane.b32.xlu0 %v155, 92
        %v464 = vpop.permute.xlu0 %463
        %466 = vrot.lane.b32.xlu0 %v155, 88
        %v467 = vpop.permute.xlu0 %466
        %469 = vrot.lane.b32.xlu0 %v155, 84
        %v470 = vpop.permute.xlu0 %469
        %472 = vrot.lane.b32.xlu0 %v155, 80
        %v473 = vpop.permute.xlu0 %472
        %475 = vrot.lane.b32.xlu0 %v155, 76
        %v476 = vpop.permute.xlu0 %475
        %478 = vrot.lane.b32.xlu0 %v155, 72
        %v479 = vpop.permute.xlu0 %478
        %481 = vrot.lane.b32.xlu0 %v155, 68
        %v482 = vpop.permute.xlu0 %481
        %484 = vrot.lane.b32.xlu0 %v155, 64
        %v485 = vpop.permute.xlu0 %484
        %487 = vrot.lane.b32.xlu0 %v155, 60
        %v488 = vpop.permute.xlu0 %487
        %490 = vrot.lane.b32.xlu0 %v155, 56
        %v491 = vpop.permute.xlu0 %490
        %493 = vrot.lane.b32.xlu0 %v155, 52
        %v494 = vpop.permute.xlu0 %493
        %496 = vrot.lane.b32.xlu0 %v155, 48
        %v497 = vpop.permute.xlu0 %496
        %499 = vrot.lane.b32.xlu0 %v155, 44
        %v500 = vpop.permute.xlu0 %499
        %502 = vrot.lane.b32.xlu0 %v155, 40
        %v503 = vpop.permute.xlu0 %502
        %505 = vrot.lane.b32.xlu0 %v155, 36
        %v506 = vpop.permute.xlu0 %505
        %508 = vrot.lane.b32.xlu0 %v155, 32
        %v509 = vpop.permute.xlu0 %508
        %511 = vrot.lane.b32.xlu0 %v155, 28
        %v512 = vpop.permute.xlu0 %511
        %514 = vrot.lane.b32.xlu0 %v155, 24
        %v515 = vpop.permute.xlu0 %514
        %517 = vrot.lane.b32.xlu0 %v155, 20
        %v518 = vpop.permute.xlu0 %517
        %520 = vrot.lane.b32.xlu0 %v155, 16
        %v521 = vpop.permute.xlu0 %520
        %523 = vrot.lane.b32.xlu0 %v155, 12
        %v524 = vpop.permute.xlu0 %523
        %526 = vrot.lane.b32.xlu0 %v155, 8
        %v527 = vpop.permute.xlu0 %526
        %529 = vrot.lane.b32.xlu0 %v155, 4
        %v530 = vpop.permute.xlu0 %529
        %v532 = vcombine.low %v152, %v161
        %v533 = vcombine.high %v152, %v161
        %v535 = vunpack.c.l.s4 1983009808
        %v536 = vunpack.c.0.s8 %v535
        %v537 = vlaneseq
        %v538 = vshrl.u32 %v537, 7
        %v539 = vsub.s32 %v536, %v538
        %v540 = vrot.slane %v532, %v539
        %v542 = vunpack.c.l.s4 1983009808
        %v543 = vunpack.c.0.s8 %v542
        %v544 = vlaneseq
        %v545 = vshrl.u32 %v544, 7
        %v546 = vsub.s32 %v543, %v545
        %v547 = vrot.slane %v533, %v546
        %v548 = vcombine.low %v158, %v164
        %v549 = vcombine.high %v158, %v164
        %v551 = vunpack.c.l.s4 1983009808
        %v552 = vunpack.c.0.s8 %v551
        %v553 = vlaneseq
        %v554 = vshrl.u32 %v553, 7
        %v555 = vsub.s32 %v552, %v554
        %v556 = vrot.slane %v548, %v555
        %v558 = vunpack.c.l.s4 1983009808
        %v559 = vunpack.c.0.s8 %v558
        %v560 = vlaneseq
        %v561 = vshrl.u32 %v560, 7
        %v562 = vsub.s32 %v559, %v561
        %v563 = vrot.slane %v549, %v562
        %v564 = vcombine.low %v167, %v173
        %v565 = vcombine.high %v167, %v173
        %v567 = vunpack.c.l.s4 1983009808
        %v568 = vunpack.c.0.s8 %v567
        %v569 = vlaneseq
        %v570 = vshrl.u32 %v569, 7
        %v571 = vsub.s32 %v568, %v570
        %v572 = vrot.slane %v564, %v571
        %v574 = vunpack.c.l.s4 1983009808
        %v575 = vunpack.c.0.s8 %v574
        %v576 = vlaneseq
        %v577 = vshrl.u32 %v576, 7
        %v578 = vsub.s32 %v575, %v577
        %v579 = vrot.slane %v565, %v578
        %v580 = vcombine.low %v170, %v176
        %v581 = vcombine.high %v170, %v176
        %v583 = vunpack.c.l.s4 1983009808
        %v584 = vunpack.c.0.s8 %v583
        %v585 = vlaneseq
        %v586 = vshrl.u32 %v585, 7
        %v587 = vsub.s32 %v584, %v586
        %v588 = vrot.slane %v580, %v587
        %v590 = vunpack.c.l.s4 1983009808
        %v591 = vunpack.c.0.s8 %v590
        %v592 = vlaneseq
        %v593 = vshrl.u32 %v592, 7
        %v594 = vsub.s32 %v591, %v593
        %v595 = vrot.slane %v581, %v594
        %v596 = vcombine.low %v540, %v556
        %v597 = vcombine.high %v540, %v556
        %v599 = vunpack.c.l.s4 1934713408
        %v600 = vunpack.c.0.s8 %v599
        %v601 = vlaneseq
        %v602 = vshrl.u32 %v601, 7
        %v603 = vsub.s32 %v600, %v602
        %v604 = vrot.slane %v596, %v603
        %v606 = vunpack.c.l.s4 1934713408
        %v607 = vunpack.c.0.s8 %v606
        %v608 = vlaneseq
        %v609 = vshrl.u32 %v608, 7
        %v610 = vsub.s32 %v607, %v609
        %v611 = vrot.slane %v597, %v610
        %v612 = vcombine.low %v547, %v563
        %v613 = vcombine.high %v547, %v563
        %v615 = vunpack.c.l.s4 1934713408
        %v616 = vunpack.c.0.s8 %v615
        %v617 = vlaneseq
        %v618 = vshrl.u32 %v617, 7
        %v619 = vsub.s32 %v616, %v618
        %v620 = vrot.slane %v612, %v619
        %v622 = vunpack.c.l.s4 1934713408
        %v623 = vunpack.c.0.s8 %v622
        %v624 = vlaneseq
        %v625 = vshrl.u32 %v624, 7
        %v626 = vsub.s32 %v623, %v625
        %v627 = vrot.slane %v613, %v626
        %v628 = vcombine.low %v572, %v588
        %v629 = vcombine.high %v572, %v588
        %v631 = vunpack.c.l.s4 1934713408
        %v632 = vunpack.c.0.s8 %v631
        %v633 = vlaneseq
        %v634 = vshrl.u32 %v633, 7
        %v635 = vsub.s32 %v632, %v634
        %v636 = vrot.slane %v628, %v635
        %v638 = vunpack.c.l.s4 1934713408
        %v639 = vunpack.c.0.s8 %v638
        %v640 = vlaneseq
        %v641 = vshrl.u32 %v640, 7
        %v642 = vsub.s32 %v639, %v641
        %v643 = vrot.slane %v629, %v642
        %v644 = vcombine.low %v579, %v595
        %v645 = vcombine.high %v579, %v595
        %v647 = vunpack.c.l.s4 1934713408
        %v648 = vunpack.c.0.s8 %v647
        %v649 = vlaneseq
        %v650 = vshrl.u32 %v649, 7
        %v651 = vsub.s32 %v648, %v650
        %v652 = vrot.slane %v644, %v651
        %v654 = vunpack.c.l.s4 1934713408
        %v655 = vunpack.c.0.s8 %v654
        %v656 = vlaneseq
        %v657 = vshrl.u32 %v656, 7
        %v658 = vsub.s32 %v655, %v657
        %v659 = vrot.slane %v645, %v658
        %v660 = vcombine.low %v604, %v636
        %v661 = vcombine.high %v604, %v636
        %v662 = vcombine.low %v611, %v643
        %v663 = vcombine.high %v611, %v643
        %v664 = vcombine.low %v620, %v652
        %v665 = vcombine.high %v620, %v652
        %v666 = vcombine.low %v627, %v659
        %v667 = vcombine.high %v627, %v659
        %v668 = vcombine.low %v179, %v185
        %v669 = vcombine.high %v179, %v185
        %v671 = vunpack.c.l.s4 1983009808
        %v672 = vunpack.c.0.s8 %v671
        %v673 = vlaneseq
        %v674 = vshrl.u32 %v673, 7
        %v675 = vsub.s32 %v672, %v674
        %v676 = vrot.slane %v668, %v675
        %v678 = vunpack.c.l.s4 1983009808
        %v679 = vunpack.c.0.s8 %v678
        %v680 = vlaneseq
        %v681 = vshrl.u32 %v680, 7
        %v682 = vsub.s32 %v679, %v681
        %v683 = vrot.slane %v669, %v682
        %v684 = vcombine.low %v182, %v188
        %v685 = vcombine.high %v182, %v188
        %v687 = vunpack.c.l.s4 1983009808
        %v688 = vunpack.c.0.s8 %v687
        %v689 = vlaneseq
        %v690 = vshrl.u32 %v689, 7
        %v691 = vsub.s32 %v688, %v690
        %v692 = vrot.slane %v684, %v691
        %v694 = vunpack.c.l.s4 1983009808
        %v695 = vunpack.c.0.s8 %v694
        %v696 = vlaneseq
        %v697 = vshrl.u32 %v696, 7
        %v698 = vsub.s32 %v695, %v697
        %v699 = vrot.slane %v685, %v698
        %v700 = vcombine.low %v191, %v197
        %v701 = vcombine.high %v191, %v197
        %v703 = vunpack.c.l.s4 1983009808
        %v704 = vunpack.c.0.s8 %v703
        %v705 = vlaneseq
        %v706 = vshrl.u32 %v705, 7
        %v707 = vsub.s32 %v704, %v706
        %v708 = vrot.slane %v700, %v707
        %v710 = vunpack.c.l.s4 1983009808
        %v711 = vunpack.c.0.s8 %v710
        %v712 = vlaneseq
        %v713 = vshrl.u32 %v712, 7
        %v714 = vsub.s32 %v711, %v713
        %v715 = vrot.slane %v701, %v714
        %v716 = vcombine.low %v194, %v200
        %v717 = vcombine.high %v194, %v200
        %v719 = vunpack.c.l.s4 1983009808
        %v720 = vunpack.c.0.s8 %v719
        %v721 = vlaneseq
        %v722 = vshrl.u32 %v721, 7
        %v723 = vsub.s32 %v720, %v722
        %v724 = vrot.slane %v716, %v723
        %v726 = vunpack.c.l.s4 1983009808
        %v727 = vunpack.c.0.s8 %v726
        %v728 = vlaneseq
        %v729 = vshrl.u32 %v728, 7
        %v730 = vsub.s32 %v727, %v729
        %v731 = vrot.slane %v717, %v730
        %v732 = vcombine.low %v676, %v692
        %v733 = vcombine.high %v676, %v692
        %v735 = vunpack.c.l.s4 1934713408
        %v736 = vunpack.c.0.s8 %v735
        %v737 = vlaneseq
        %v738 = vshrl.u32 %v737, 7
        %v739 = vsub.s32 %v736, %v738
        %v740 = vrot.slane %v732, %v739
        %v742 = vunpack.c.l.s4 1934713408
        %v743 = vunpack.c.0.s8 %v742
        %v744 = vlaneseq
        %v745 = vshrl.u32 %v744, 7
        %v746 = vsub.s32 %v743, %v745
        %v747 = vrot.slane %v733, %v746
        %v748 = vcombine.low %v683, %v699
        %v749 = vcombine.high %v683, %v699
        %v751 = vunpack.c.l.s4 1934713408
        %v752 = vunpack.c.0.s8 %v751
        %v753 = vlaneseq
        %v754 = vshrl.u32 %v753, 7
        %v755 = vsub.s32 %v752, %v754
        %v756 = vrot.slane %v748, %v755
        %v758 = vunpack.c.l.s4 1934713408
        %v759 = vunpack.c.0.s8 %v758
        %v760 = vlaneseq
        %v761 = vshrl.u32 %v760, 7
        %v762 = vsub.s32 %v759, %v761
        %v763 = vrot.slane %v749, %v762
        %v764 = vcombine.low %v708, %v724
        %v765 = vcombine.high %v708, %v724
        %v767 = vunpack.c.l.s4 1934713408
        %v768 = vunpack.c.0.s8 %v767
        %v769 = vlaneseq
        %v770 = vshrl.u32 %v769, 7
        %v771 = vsub.s32 %v768, %v770
        %v772 = vrot.slane %v764, %v771
        %v774 = vunpack.c.l.s4 1934713408
        %v775 = vunpack.c.0.s8 %v774
        %v776 = vlaneseq
        %v777 = vshrl.u32 %v776, 7
        %v778 = vsub.s32 %v775, %v777
        %v779 = vrot.slane %v765, %v778
        %v780 = vcombine.low %v715, %v731
        %v781 = vcombine.high %v715, %v731
        %v783 = vunpack.c.l.s4 1934713408
        %v784 = vunpack.c.0.s8 %v783
        %v785 = vlaneseq
        %v786 = vshrl.u32 %v785, 7
        %v787 = vsub.s32 %v784, %v786
        %v788 = vrot.slane %v780, %v787
        %v790 = vunpack.c.l.s4 1934713408
        %v791 = vunpack.c.0.s8 %v790
        %v792 = vlaneseq
        %v793 = vshrl.u32 %v792, 7
        %v794 = vsub.s32 %v791, %v793
        %v795 = vrot.slane %v781, %v794
        %v796 = vcombine.low %v740, %v772
        %v797 = vcombine.high %v740, %v772
        %v798 = vcombine.low %v747, %v779
        %v799 = vcombine.high %v747, %v779
        %v800 = vcombine.low %v756, %v788
        %v801 = vcombine.high %v756, %v788
        %v802 = vcombine.low %v763, %v795
        %v803 = vcombine.high %v763, %v795
        %v804 = vcombine.low %v203, %v209
        %v805 = vcombine.high %v203, %v209
        %v807 = vunpack.c.l.s4 1983009808
        %v808 = vunpack.c.0.s8 %v807
        %v809 = vlaneseq
        %v810 = vshrl.u32 %v809, 7
        %v811 = vsub.s32 %v808, %v810
        %v812 = vrot.slane %v804, %v811
        %v814 = vunpack.c.l.s4 1983009808
        %v815 = vunpack.c.0.s8 %v814
        %v816 = vlaneseq
        %v817 = vshrl.u32 %v816, 7
        %v818 = vsub.s32 %v815, %v817
        %v819 = vrot.slane %v805, %v818
        %v820 = vcombine.low %v206, %v212
        %v821 = vcombine.high %v206, %v212
        %v823 = vunpack.c.l.s4 1983009808
        %v824 = vunpack.c.0.s8 %v823
        %v825 = vlaneseq
        %v826 = vshrl.u32 %v825, 7
        %v827 = vsub.s32 %v824, %v826
        %v828 = vrot.slane %v820, %v827
        %v830 = vunpack.c.l.s4 1983009808
        %v831 = vunpack.c.0.s8 %v830
        %v832 = vlaneseq
        %v833 = vshrl.u32 %v832, 7
        %v834 = vsub.s32 %v831, %v833
        %v835 = vrot.slane %v821, %v834
        %v836 = vcombine.low %v215, %v221
        %v837 = vcombine.high %v215, %v221
        %v839 = vunpack.c.l.s4 1983009808
        %v840 = vunpack.c.0.s8 %v839
        %v841 = vlaneseq
        %v842 = vshrl.u32 %v841, 7
        %v843 = vsub.s32 %v840, %v842
        %v844 = vrot.slane %v836, %v843
        %v846 = vunpack.c.l.s4 1983009808
        %v847 = vunpack.c.0.s8 %v846
        %v848 = vlaneseq
        %v849 = vshrl.u32 %v848, 7
        %v850 = vsub.s32 %v847, %v849
        %v851 = vrot.slane %v837, %v850
        %v852 = vcombine.low %v218, %v224
        %v853 = vcombine.high %v218, %v224
        %v855 = vunpack.c.l.s4 1983009808
        %v856 = vunpack.c.0.s8 %v855
        %v857 = vlaneseq
        %v858 = vshrl.u32 %v857, 7
        %v859 = vsub.s32 %v856, %v858
        %v860 = vrot.slane %v852, %v859
        %v862 = vunpack.c.l.s4 1983009808
        %v863 = vunpack.c.0.s8 %v862
        %v864 = vlaneseq
        %v865 = vshrl.u32 %v864, 7
        %v866 = vsub.s32 %v863, %v865
        %v867 = vrot.slane %v853, %v866
        %v868 = vcombine.low %v812, %v828
        %v869 = vcombine.high %v812, %v828
        %v871 = vunpack.c.l.s4 1934713408
        %v872 = vunpack.c.0.s8 %v871
        %v873 = vlaneseq
        %v874 = vshrl.u32 %v873, 7
        %v875 = vsub.s32 %v872, %v874
        %v876 = vrot.slane %v868, %v875
        %v878 = vunpack.c.l.s4 1934713408
        %v879 = vunpack.c.0.s8 %v878
        %v880 = vlaneseq
        %v881 = vshrl.u32 %v880, 7
        %v882 = vsub.s32 %v879, %v881
        %v883 = vrot.slane %v869, %v882
        %v884 = vcombine.low %v819, %v835
        %v885 = vcombine.high %v819, %v835
        %v887 = vunpack.c.l.s4 1934713408
        %v888 = vunpack.c.0.s8 %v887
        %v889 = vlaneseq
        %v890 = vshrl.u32 %v889, 7
        %v891 = vsub.s32 %v888, %v890
        %v892 = vrot.slane %v884, %v891
        %v894 = vunpack.c.l.s4 1934713408
        %v895 = vunpack.c.0.s8 %v894
        %v896 = vlaneseq
        %v897 = vshrl.u32 %v896, 7
        %v898 = vsub.s32 %v895, %v897
        %v899 = vrot.slane %v885, %v898
        %v900 = vcombine.low %v844, %v860
        %v901 = vcombine.high %v844, %v860
        %v903 = vunpack.c.l.s4 1934713408
        %v904 = vunpack.c.0.s8 %v903
        %v905 = vlaneseq
        %v906 = vshrl.u32 %v905, 7
        %v907 = vsub.s32 %v904, %v906
        %v908 = vrot.slane %v900, %v907
        %v910 = vunpack.c.l.s4 1934713408
        %v911 = vunpack.c.0.s8 %v910
        %v912 = vlaneseq
        %v913 = vshrl.u32 %v912, 7
        %v914 = vsub.s32 %v911, %v913
        %v915 = vrot.slane %v901, %v914
        %v916 = vcombine.low %v851, %v867
        %v917 = vcombine.high %v851, %v867
        %v919 = vunpack.c.l.s4 1934713408
        %v920 = vunpack.c.0.s8 %v919
        %v921 = vlaneseq
        %v922 = vshrl.u32 %v921, 7
        %v923 = vsub.s32 %v920, %v922
        %v924 = vrot.slane %v916, %v923
        %v926 = vunpack.c.l.s4 1934713408
        %v927 = vunpack.c.0.s8 %v926
        %v928 = vlaneseq
        %v929 = vshrl.u32 %v928, 7
        %v930 = vsub.s32 %v927, %v929
        %v931 = vrot.slane %v917, %v930
        %v932 = vcombine.low %v876, %v908
        %v933 = vcombine.high %v876, %v908
        %v934 = vcombine.low %v883, %v915
        %v935 = vcombine.high %v883, %v915
        %v936 = vcombine.low %v892, %v924
        %v937 = vcombine.high %v892, %v924
        %v938 = vcombine.low %v899, %v931
        %v939 = vcombine.high %v899, %v931
        %v940 = vcombine.low %v227, %v233
        %v941 = vcombine.high %v227, %v233
        %v943 = vunpack.c.l.s4 1983009808
        %v944 = vunpack.c.0.s8 %v943
        %v945 = vlaneseq
        %v946 = vshrl.u32 %v945, 7
        %v947 = vsub.s32 %v944, %v946
        %v948 = vrot.slane %v940, %v947
        %v950 = vunpack.c.l.s4 1983009808
        %v951 = vunpack.c.0.s8 %v950
        %v952 = vlaneseq
        %v953 = vshrl.u32 %v952, 7
        %v954 = vsub.s32 %v951, %v953
        %v955 = vrot.slane %v941, %v954
        %v956 = vcombine.low %v230, %v236
        %v957 = vcombine.high %v230, %v236
        %v959 = vunpack.c.l.s4 1983009808
        %v960 = vunpack.c.0.s8 %v959
        %v961 = vlaneseq
        %v962 = vshrl.u32 %v961, 7
        %v963 = vsub.s32 %v960, %v962
        %v964 = vrot.slane %v956, %v963
        %v966 = vunpack.c.l.s4 1983009808
        %v967 = vunpack.c.0.s8 %v966
        %v968 = vlaneseq
        %v969 = vshrl.u32 %v968, 7
        %v970 = vsub.s32 %v967, %v969
        %v971 = vrot.slane %v957, %v970
        %v972 = vcombine.low %v239, %v245
        %v973 = vcombine.high %v239, %v245
        %v975 = vunpack.c.l.s4 1983009808
        %v976 = vunpack.c.0.s8 %v975
        %v977 = vlaneseq
        %v978 = vshrl.u32 %v977, 7
        %v979 = vsub.s32 %v976, %v978
        %v980 = vrot.slane %v972, %v979
        %v982 = vunpack.c.l.s4 1983009808
        %v983 = vunpack.c.0.s8 %v982
        %v984 = vlaneseq
        %v985 = vshrl.u32 %v984, 7
        %v986 = vsub.s32 %v983, %v985
        %v987 = vrot.slane %v973, %v986
        %v988 = vcombine.low %v242, %v248
        %v989 = vcombine.high %v242, %v248
        %v991 = vunpack.c.l.s4 1983009808
        %v992 = vunpack.c.0.s8 %v991
        %v993 = vlaneseq
        %v994 = vshrl.u32 %v993, 7
        %v995 = vsub.s32 %v992, %v994
        %v996 = vrot.slane %v988, %v995
        %v998 = vunpack.c.l.s4 1983009808
        %v999 = vunpack.c.0.s8 %v998
        %v1000 = vlaneseq
        %v1001 = vshrl.u32 %v1000, 7
        %v1002 = vsub.s32 %v999, %v1001
        %v1003 = vrot.slane %v989, %v1002
        %v1004 = vcombine.low %v948, %v964
        %v1005 = vcombine.high %v948, %v964
        %v1007 = vunpack.c.l.s4 1934713408
        %v1008 = vunpack.c.0.s8 %v1007
        %v1009 = vlaneseq
        %v1010 = vshrl.u32 %v1009, 7
        %v1011 = vsub.s32 %v1008, %v1010
        %v1012 = vrot.slane %v1004, %v1011
        %v1014 = vunpack.c.l.s4 1934713408
        %v1015 = vunpack.c.0.s8 %v1014
        %v1016 = vlaneseq
        %v1017 = vshrl.u32 %v1016, 7
        %v1018 = vsub.s32 %v1015, %v1017
        %v1019 = vrot.slane %v1005, %v1018
        %v1020 = vcombine.low %v955, %v971
        %v1021 = vcombine.high %v955, %v971
        %v1023 = vunpack.c.l.s4 1934713408
        %v1024 = vunpack.c.0.s8 %v1023
        %v1025 = vlaneseq
        %v1026 = vshrl.u32 %v1025, 7
        %v1027 = vsub.s32 %v1024, %v1026
        %v1028 = vrot.slane %v1020, %v1027
        %v1030 = vunpack.c.l.s4 1934713408
        %v1031 = vunpack.c.0.s8 %v1030
        %v1032 = vlaneseq
        %v1033 = vshrl.u32 %v1032, 7
        %v1034 = vsub.s32 %v1031, %v1033
        %v1035 = vrot.slane %v1021, %v1034
        %v1036 = vcombine.low %v980, %v996
        %v1037 = vcombine.high %v980, %v996
        %v1039 = vunpack.c.l.s4 1934713408
        %v1040 = vunpack.c.0.s8 %v1039
        %v1041 = vlaneseq
        %v1042 = vshrl.u32 %v1041, 7
        %v1043 = vsub.s32 %v1040, %v1042
        %v1044 = vrot.slane %v1036, %v1043
        %v1046 = vunpack.c.l.s4 1934713408
        %v1047 = vunpack.c.0.s8 %v1046
        %v1048 = vlaneseq
        %v1049 = vshrl.u32 %v1048, 7
        %v1050 = vsub.s32 %v1047, %v1049
        %v1051 = vrot.slane %v1037, %v1050
        %v1052 = vcombine.low %v987, %v1003
        %v1053 = vcombine.high %v987, %v1003
        %v1055 = vunpack.c.l.s4 1934713408
        %v1056 = vunpack.c.0.s8 %v1055
        %v1057 = vlaneseq
        %v1058 = vshrl.u32 %v1057, 7
        %v1059 = vsub.s32 %v1056, %v1058
        %v1060 = vrot.slane %v1052, %v1059
        %v1062 = vunpack.c.l.s4 1934713408
        %v1063 = vunpack.c.0.s8 %v1062
        %v1064 = vlaneseq
        %v1065 = vshrl.u32 %v1064, 7
        %v1066 = vsub.s32 %v1063, %v1065
        %v1067 = vrot.slane %v1053, %v1066
        %v1068 = vcombine.low %v1012, %v1044
        %v1069 = vcombine.high %v1012, %v1044
        %v1070 = vcombine.low %v1019, %v1051
        %v1071 = vcombine.high %v1019, %v1051
        %v1072 = vcombine.low %v1028, %v1060
        %v1073 = vcombine.high %v1028, %v1060
        %v1074 = vcombine.low %v1035, %v1067
        %v1075 = vcombine.high %v1035, %v1067
        %v1076 = vcombine.low %v153, %v255
        %v1077 = vcombine.high %v153, %v255
        %v1079 = vunpack.c.l.s4 1983009808
        %v1080 = vunpack.c.0.s8 %v1079
        %v1081 = vlaneseq
        %v1082 = vshrl.u32 %v1081, 7
        %v1083 = vsub.s32 %v1080, %v1082
        %v1084 = vrot.slane %v1076, %v1083
        %v1086 = vunpack.c.l.s4 1983009808
        %v1087 = vunpack.c.0.s8 %v1086
        %v1088 = vlaneseq
        %v1089 = vshrl.u32 %v1088, 7
        %v1090 = vsub.s32 %v1087, %v1089
        %v1091 = vrot.slane %v1077, %v1090
        %v1092 = vcombine.low %v252, %v258
        %v1093 = vcombine.high %v252, %v258
        %v1095 = vunpack.c.l.s4 1983009808
        %v1096 = vunpack.c.0.s8 %v1095
        %v1097 = vlaneseq
        %v1098 = vshrl.u32 %v1097, 7
        %v1099 = vsub.s32 %v1096, %v1098
        %v1100 = vrot.slane %v1092, %v1099
        %v1102 = vunpack.c.l.s4 1983009808
        %v1103 = vunpack.c.0.s8 %v1102
        %v1104 = vlaneseq
        %v1105 = vshrl.u32 %v1104, 7
        %v1106 = vsub.s32 %v1103, %v1105
        %v1107 = vrot.slane %v1093, %v1106
        %v1108 = vcombine.low %v261, %v267
        %v1109 = vcombine.high %v261, %v267
        %v1111 = vunpack.c.l.s4 1983009808
        %v1112 = vunpack.c.0.s8 %v1111
        %v1113 = vlaneseq
        %v1114 = vshrl.u32 %v1113, 7
        %v1115 = vsub.s32 %v1112, %v1114
        %v1116 = vrot.slane %v1108, %v1115
        %v1118 = vunpack.c.l.s4 1983009808
        %v1119 = vunpack.c.0.s8 %v1118
        %v1120 = vlaneseq
        %v1121 = vshrl.u32 %v1120, 7
        %v1122 = vsub.s32 %v1119, %v1121
        %v1123 = vrot.slane %v1109, %v1122
        %v1124 = vcombine.low %v264, %v270
        %v1125 = vcombine.high %v264, %v270
        %v1127 = vunpack.c.l.s4 1983009808
        %v1128 = vunpack.c.0.s8 %v1127
        %v1129 = vlaneseq
        %v1130 = vshrl.u32 %v1129, 7
        %v1131 = vsub.s32 %v1128, %v1130
        %v1132 = vrot.slane %v1124, %v1131
        %v1134 = vunpack.c.l.s4 1983009808
        %v1135 = vunpack.c.0.s8 %v1134
        %v1136 = vlaneseq
        %v1137 = vshrl.u32 %v1136, 7
        %v1138 = vsub.s32 %v1135, %v1137
        %v1139 = vrot.slane %v1125, %v1138
        %v1140 = vcombine.low %v1084, %v1100
        %v1141 = vcombine.high %v1084, %v1100
        %v1143 = vunpack.c.l.s4 1934713408
        %v1144 = vunpack.c.0.s8 %v1143
        %v1145 = vlaneseq
        %v1146 = vshrl.u32 %v1145, 7
        %v1147 = vsub.s32 %v1144, %v1146
        %v1148 = vrot.slane %v1140, %v1147
        %v1150 = vunpack.c.l.s4 1934713408
        %v1151 = vunpack.c.0.s8 %v1150
        %v1152 = vlaneseq
        %v1153 = vshrl.u32 %v1152, 7
        %v1154 = vsub.s32 %v1151, %v1153
        %v1155 = vrot.slane %v1141, %v1154
        %v1156 = vcombine.low %v1091, %v1107
        %v1157 = vcombine.high %v1091, %v1107
        %v1159 = vunpack.c.l.s4 1934713408
        %v1160 = vunpack.c.0.s8 %v1159
        %v1161 = vlaneseq
        %v1162 = vshrl.u32 %v1161, 7
        %v1163 = vsub.s32 %v1160, %v1162
        %v1164 = vrot.slane %v1156, %v1163
        %v1166 = vunpack.c.l.s4 1934713408
        %v1167 = vunpack.c.0.s8 %v1166
        %v1168 = vlaneseq
        %v1169 = vshrl.u32 %v1168, 7
        %v1170 = vsub.s32 %v1167, %v1169
        %v1171 = vrot.slane %v1157, %v1170
        %v1172 = vcombine.low %v1116, %v1132
        %v1173 = vcombine.high %v1116, %v1132
        %v1175 = vunpack.c.l.s4 1934713408
        %v1176 = vunpack.c.0.s8 %v1175
        %v1177 = vlaneseq
        %v1178 = vshrl.u32 %v1177, 7
        %v1179 = vsub.s32 %v1176, %v1178
        %v1180 = vrot.slane %v1172, %v1179
        %v1182 = vunpack.c.l.s4 1934713408
        %v1183 = vunpack.c.0.s8 %v1182
        %v1184 = vlaneseq
        %v1185 = vshrl.u32 %v1184, 7
        %v1186 = vsub.s32 %v1183, %v1185
        %v1187 = vrot.slane %v1173, %v1186
        %v1188 = vcombine.low %v1123, %v1139
        %v1189 = vcombine.high %v1123, %v1139
        %v1191 = vunpack.c.l.s4 1934713408
        %v1192 = vunpack.c.0.s8 %v1191
        %v1193 = vlaneseq
        %v1194 = vshrl.u32 %v1193, 7
        %v1195 = vsub.s32 %v1192, %v1194
        %v1196 = vrot.slane %v1188, %v1195
        %v1198 = vunpack.c.l.s4 1934713408
        %v1199 = vunpack.c.0.s8 %v1198
        %v1200 = vlaneseq
        %v1201 = vshrl.u32 %v1200, 7
        %v1202 = vsub.s32 %v1199, %v1201
        %v1203 = vrot.slane %v1189, %v1202
        %v1204 = vcombine.low %v1148, %v1180
        %v1205 = vcombine.high %v1148, %v1180
        %v1206 = vcombine.low %v1155, %v1187
        %v1207 = vcombine.high %v1155, %v1187
        %v1208 = vcombine.low %v1164, %v1196
        %v1209 = vcombine.high %v1164, %v1196
        %v1210 = vcombine.low %v1171, %v1203
        %v1211 = vcombine.high %v1171, %v1203
        %v1212 = vcombine.low %v273, %v279
        %v1213 = vcombine.high %v273, %v279
        %v1215 = vunpack.c.l.s4 1983009808
        %v1216 = vunpack.c.0.s8 %v1215
        %v1217 = vlaneseq
        %v1218 = vshrl.u32 %v1217, 7
        %v1219 = vsub.s32 %v1216, %v1218
        %v1220 = vrot.slane %v1212, %v1219
        %v1222 = vunpack.c.l.s4 1983009808
        %v1223 = vunpack.c.0.s8 %v1222
        %v1224 = vlaneseq
        %v1225 = vshrl.u32 %v1224, 7
        %v1226 = vsub.s32 %v1223, %v1225
        %v1227 = vrot.slane %v1213, %v1226
        %v1228 = vcombine.low %v276, %v282
        %v1229 = vcombine.high %v276, %v282
        %v1231 = vunpack.c.l.s4 1983009808
        %v1232 = vunpack.c.0.s8 %v1231
        %v1233 = vlaneseq
        %v1234 = vshrl.u32 %v1233, 7
        %v1235 = vsub.s32 %v1232, %v1234
        %v1236 = vrot.slane %v1228, %v1235
        %v1238 = vunpack.c.l.s4 1983009808
        %v1239 = vunpack.c.0.s8 %v1238
        %v1240 = vlaneseq
        %v1241 = vshrl.u32 %v1240, 7
        %v1242 = vsub.s32 %v1239, %v1241
        %v1243 = vrot.slane %v1229, %v1242
        %v1244 = vcombine.low %v285, %v291
        %v1245 = vcombine.high %v285, %v291
        %v1247 = vunpack.c.l.s4 1983009808
        %v1248 = vunpack.c.0.s8 %v1247
        %v1249 = vlaneseq
        %v1250 = vshrl.u32 %v1249, 7
        %v1251 = vsub.s32 %v1248, %v1250
        %v1252 = vrot.slane %v1244, %v1251
        %v1254 = vunpack.c.l.s4 1983009808
        %v1255 = vunpack.c.0.s8 %v1254
        %v1256 = vlaneseq
        %v1257 = vshrl.u32 %v1256, 7
        %v1258 = vsub.s32 %v1255, %v1257
        %v1259 = vrot.slane %v1245, %v1258
        %v1260 = vcombine.low %v288, %v294
        %v1261 = vcombine.high %v288, %v294
        %v1263 = vunpack.c.l.s4 1983009808
        %v1264 = vunpack.c.0.s8 %v1263
        %v1265 = vlaneseq
        %v1266 = vshrl.u32 %v1265, 7
        %v1267 = vsub.s32 %v1264, %v1266
        %v1268 = vrot.slane %v1260, %v1267
        %v1270 = vunpack.c.l.s4 1983009808
        %v1271 = vunpack.c.0.s8 %v1270
        %v1272 = vlaneseq
        %v1273 = vshrl.u32 %v1272, 7
        %v1274 = vsub.s32 %v1271, %v1273
        %v1275 = vrot.slane %v1261, %v1274
        %v1276 = vcombine.low %v1220, %v1236
        %v1277 = vcombine.high %v1220, %v1236
        %v1279 = vunpack.c.l.s4 1934713408
        %v1280 = vunpack.c.0.s8 %v1279
        %v1281 = vlaneseq
        %v1282 = vshrl.u32 %v1281, 7
        %v1283 = vsub.s32 %v1280, %v1282
        %v1284 = vrot.slane %v1276, %v1283
        %v1286 = vunpack.c.l.s4 1934713408
        %v1287 = vunpack.c.0.s8 %v1286
        %v1288 = vlaneseq
        %v1289 = vshrl.u32 %v1288, 7
        %v1290 = vsub.s32 %v1287, %v1289
        %v1291 = vrot.slane %v1277, %v1290
        %v1292 = vcombine.low %v1227, %v1243
        %v1293 = vcombine.high %v1227, %v1243
        %v1295 = vunpack.c.l.s4 1934713408
        %v1296 = vunpack.c.0.s8 %v1295
        %v1297 = vlaneseq
        %v1298 = vshrl.u32 %v1297, 7
        %v1299 = vsub.s32 %v1296, %v1298
        %v1300 = vrot.slane %v1292, %v1299
        %v1302 = vunpack.c.l.s4 1934713408
        %v1303 = vunpack.c.0.s8 %v1302
        %v1304 = vlaneseq
        %v1305 = vshrl.u32 %v1304, 7
        %v1306 = vsub.s32 %v1303, %v1305
        %v1307 = vrot.slane %v1293, %v1306
        %v1308 = vcombine.low %v1252, %v1268
        %v1309 = vcombine.high %v1252, %v1268
        %v1311 = vunpack.c.l.s4 1934713408
        %v1312 = vunpack.c.0.s8 %v1311
        %v1313 = vlaneseq
        %v1314 = vshrl.u32 %v1313, 7
        %v1315 = vsub.s32 %v1312, %v1314
        %v1316 = vrot.slane %v1308, %v1315
        %v1318 = vunpack.c.l.s4 1934713408
        %v1319 = vunpack.c.0.s8 %v1318
        %v1320 = vlaneseq
        %v1321 = vshrl.u32 %v1320, 7
        %v1322 = vsub.s32 %v1319, %v1321
        %v1323 = vrot.slane %v1309, %v1322
        %v1324 = vcombine.low %v1259, %v1275
        %v1325 = vcombine.high %v1259, %v1275
        %v1327 = vunpack.c.l.s4 1934713408
        %v1328 = vunpack.c.0.s8 %v1327
        %v1329 = vlaneseq
        %v1330 = vshrl.u32 %v1329, 7
        %v1331 = vsub.s32 %v1328, %v1330
        %v1332 = vrot.slane %v1324, %v1331
        %v1334 = vunpack.c.l.s4 1934713408
        %v1335 = vunpack.c.0.s8 %v1334
        %v1336 = vlaneseq
        %v1337 = vshrl.u32 %v1336, 7
        %v1338 = vsub.s32 %v1335, %v1337
        %v1339 = vrot.slane %v1325, %v1338
        %v1340 = vcombine.low %v1284, %v1316
        %v1341 = vcombine.high %v1284, %v1316
        %v1342 = vcombine.low %v1291, %v1323
        %v1343 = vcombine.high %v1291, %v1323
        %v1344 = vcombine.low %v1300, %v1332
        %v1345 = vcombine.high %v1300, %v1332
        %v1346 = vcombine.low %v1307, %v1339
        %v1347 = vcombine.high %v1307, %v1339
        %v1348 = vcombine.low %v297, %v303
        %v1349 = vcombine.high %v297, %v303
        %v1351 = vunpack.c.l.s4 1983009808
        %v1352 = vunpack.c.0.s8 %v1351
        %v1353 = vlaneseq
        %v1354 = vshrl.u32 %v1353, 7
        %v1355 = vsub.s32 %v1352, %v1354
        %v1356 = vrot.slane %v1348, %v1355
        %v1358 = vunpack.c.l.s4 1983009808
        %v1359 = vunpack.c.0.s8 %v1358
        %v1360 = vlaneseq
        %v1361 = vshrl.u32 %v1360, 7
        %v1362 = vsub.s32 %v1359, %v1361
        %v1363 = vrot.slane %v1349, %v1362
        %v1364 = vcombine.low %v300, %v306
        %v1365 = vcombine.high %v300, %v306
        %v1367 = vunpack.c.l.s4 1983009808
        %v1368 = vunpack.c.0.s8 %v1367
        %v1369 = vlaneseq
        %v1370 = vshrl.u32 %v1369, 7
        %v1371 = vsub.s32 %v1368, %v1370
        %v1372 = vrot.slane %v1364, %v1371
        %v1374 = vunpack.c.l.s4 1983009808
        %v1375 = vunpack.c.0.s8 %v1374
        %v1376 = vlaneseq
        %v1377 = vshrl.u32 %v1376, 7
        %v1378 = vsub.s32 %v1375, %v1377
        %v1379 = vrot.slane %v1365, %v1378
        %v1380 = vcombine.low %v309, %v315
        %v1381 = vcombine.high %v309, %v315
        %v1383 = vunpack.c.l.s4 1983009808
        %v1384 = vunpack.c.0.s8 %v1383
        %v1385 = vlaneseq
        %v1386 = vshrl.u32 %v1385, 7
        %v1387 = vsub.s32 %v1384, %v1386
        %v1388 = vrot.slane %v1380, %v1387
        %v1390 = vunpack.c.l.s4 1983009808
        %v1391 = vunpack.c.0.s8 %v1390
        %v1392 = vlaneseq
        %v1393 = vshrl.u32 %v1392, 7
        %v1394 = vsub.s32 %v1391, %v1393
        %v1395 = vrot.slane %v1381, %v1394
        %v1396 = vcombine.low %v312, %v318
        %v1397 = vcombine.high %v312, %v318
        %v1399 = vunpack.c.l.s4 1983009808
        %v1400 = vunpack.c.0.s8 %v1399
        %v1401 = vlaneseq
        %v1402 = vshrl.u32 %v1401, 7
        %v1403 = vsub.s32 %v1400, %v1402
        %v1404 = vrot.slane %v1396, %v1403
        %v1406 = vunpack.c.l.s4 1983009808
        %v1407 = vunpack.c.0.s8 %v1406
        %v1408 = vlaneseq
        %v1409 = vshrl.u32 %v1408, 7
        %v1410 = vsub.s32 %v1407, %v1409
        %v1411 = vrot.slane %v1397, %v1410
        %v1412 = vcombine.low %v1356, %v1372
        %v1413 = vcombine.high %v1356, %v1372
        %v1415 = vunpack.c.l.s4 1934713408
        %v1416 = vunpack.c.0.s8 %v1415
        %v1417 = vlaneseq
        %v1418 = vshrl.u32 %v1417, 7
        %v1419 = vsub.s32 %v1416, %v1418
        %v1420 = vrot.slane %v1412, %v1419
        %v1422 = vunpack.c.l.s4 1934713408
        %v1423 = vunpack.c.0.s8 %v1422
        %v1424 = vlaneseq
        %v1425 = vshrl.u32 %v1424, 7
        %v1426 = vsub.s32 %v1423, %v1425
        %v1427 = vrot.slane %v1413, %v1426
        %v1428 = vcombine.low %v1363, %v1379
        %v1429 = vcombine.high %v1363, %v1379
        %v1431 = vunpack.c.l.s4 1934713408
        %v1432 = vunpack.c.0.s8 %v1431
        %v1433 = vlaneseq
        %v1434 = vshrl.u32 %v1433, 7
        %v1435 = vsub.s32 %v1432, %v1434
        %v1436 = vrot.slane %v1428, %v1435
        %v1438 = vunpack.c.l.s4 1934713408
        %v1439 = vunpack.c.0.s8 %v1438
        %v1440 = vlaneseq
        %v1441 = vshrl.u32 %v1440, 7
        %v1442 = vsub.s32 %v1439, %v1441
        %v1443 = vrot.slane %v1429, %v1442
        %v1444 = vcombine.low %v1388, %v1404
        %v1445 = vcombine.high %v1388, %v1404
        %v1447 = vunpack.c.l.s4 1934713408
        %v1448 = vunpack.c.0.s8 %v1447
        %v1449 = vlaneseq
        %v1450 = vshrl.u32 %v1449, 7
        %v1451 = vsub.s32 %v1448, %v1450
        %v1452 = vrot.slane %v1444, %v1451
        %v1454 = vunpack.c.l.s4 1934713408
        %v1455 = vunpack.c.0.s8 %v1454
        %v1456 = vlaneseq
        %v1457 = vshrl.u32 %v1456, 7
        %v1458 = vsub.s32 %v1455, %v1457
        %v1459 = vrot.slane %v1445, %v1458
        %v1460 = vcombine.low %v1395, %v1411
        %v1461 = vcombine.high %v1395, %v1411
        %v1463 = vunpack.c.l.s4 1934713408
        %v1464 = vunpack.c.0.s8 %v1463
        %v1465 = vlaneseq
        %v1466 = vshrl.u32 %v1465, 7
        %v1467 = vsub.s32 %v1464, %v1466
        %v1468 = vrot.slane %v1460, %v1467
        %v1470 = vunpack.c.l.s4 1934713408
        %v1471 = vunpack.c.0.s8 %v1470
        %v1472 = vlaneseq
        %v1473 = vshrl.u32 %v1472, 7
        %v1474 = vsub.s32 %v1471, %v1473
        %v1475 = vrot.slane %v1461, %v1474
        %v1476 = vcombine.low %v1420, %v1452
        %v1477 = vcombine.high %v1420, %v1452
        %v1478 = vcombine.low %v1427, %v1459
        %v1479 = vcombine.high %v1427, %v1459
        %v1480 = vcombine.low %v1436, %v1468
        %v1481 = vcombine.high %v1436, %v1468
        %v1482 = vcombine.low %v1443, %v1475
        %v1483 = vcombine.high %v1443, %v1475
        %v1484 = vcombine.low %v321, %v327
        %v1485 = vcombine.high %v321, %v327
        %v1487 = vunpack.c.l.s4 1983009808
        %v1488 = vunpack.c.0.s8 %v1487
        %v1489 = vlaneseq
        %v1490 = vshrl.u32 %v1489, 7
        %v1491 = vsub.s32 %v1488, %v1490
        %v1492 = vrot.slane %v1484, %v1491
        %v1494 = vunpack.c.l.s4 1983009808
        %v1495 = vunpack.c.0.s8 %v1494
        %v1496 = vlaneseq
        %v1497 = vshrl.u32 %v1496, 7
        %v1498 = vsub.s32 %v1495, %v1497
        %v1499 = vrot.slane %v1485, %v1498
        %v1500 = vcombine.low %v324, %v330
        %v1501 = vcombine.high %v324, %v330
        %v1503 = vunpack.c.l.s4 1983009808
        %v1504 = vunpack.c.0.s8 %v1503
        %v1505 = vlaneseq
        %v1506 = vshrl.u32 %v1505, 7
        %v1507 = vsub.s32 %v1504, %v1506
        %v1508 = vrot.slane %v1500, %v1507
        %v1510 = vunpack.c.l.s4 1983009808
        %v1511 = vunpack.c.0.s8 %v1510
        %v1512 = vlaneseq
        %v1513 = vshrl.u32 %v1512, 7
        %v1514 = vsub.s32 %v1511, %v1513
        %v1515 = vrot.slane %v1501, %v1514
        %v1516 = vcombine.low %v333, %v339
        %v1517 = vcombine.high %v333, %v339
        %v1519 = vunpack.c.l.s4 1983009808
        %v1520 = vunpack.c.0.s8 %v1519
        %v1521 = vlaneseq
        %v1522 = vshrl.u32 %v1521, 7
        %v1523 = vsub.s32 %v1520, %v1522
        %v1524 = vrot.slane %v1516, %v1523
        %v1526 = vunpack.c.l.s4 1983009808
        %v1527 = vunpack.c.0.s8 %v1526
        %v1528 = vlaneseq
        %v1529 = vshrl.u32 %v1528, 7
        %v1530 = vsub.s32 %v1527, %v1529
        %v1531 = vrot.slane %v1517, %v1530
        %v1532 = vcombine.low %v336, %v342
        %v1533 = vcombine.high %v336, %v342
        %v1535 = vunpack.c.l.s4 1983009808
        %v1536 = vunpack.c.0.s8 %v1535
        %v1537 = vlaneseq
        %v1538 = vshrl.u32 %v1537, 7
        %v1539 = vsub.s32 %v1536, %v1538
        %v1540 = vrot.slane %v1532, %v1539
        %v1542 = vunpack.c.l.s4 1983009808
        %v1543 = vunpack.c.0.s8 %v1542
        %v1544 = vlaneseq
        %v1545 = vshrl.u32 %v1544, 7
        %v1546 = vsub.s32 %v1543, %v1545
        %v1547 = vrot.slane %v1533, %v1546
        %v1548 = vcombine.low %v1492, %v1508
        %v1549 = vcombine.high %v1492, %v1508
        %v1551 = vunpack.c.l.s4 1934713408
        %v1552 = vunpack.c.0.s8 %v1551
        %v1553 = vlaneseq
        %v1554 = vshrl.u32 %v1553, 7
        %v1555 = vsub.s32 %v1552, %v1554
        %v1556 = vrot.slane %v1548, %v1555
        %v1558 = vunpack.c.l.s4 1934713408
        %v1559 = vunpack.c.0.s8 %v1558
        %v1560 = vlaneseq
        %v1561 = vshrl.u32 %v1560, 7
        %v1562 = vsub.s32 %v1559, %v1561
        %v1563 = vrot.slane %v1549, %v1562
        %v1564 = vcombine.low %v1499, %v1515
        %v1565 = vcombine.high %v1499, %v1515
        %v1567 = vunpack.c.l.s4 1934713408
        %v1568 = vunpack.c.0.s8 %v1567
        %v1569 = vlaneseq
        %v1570 = vshrl.u32 %v1569, 7
        %v1571 = vsub.s32 %v1568, %v1570
        %v1572 = vrot.slane %v1564, %v1571
        %v1574 = vunpack.c.l.s4 1934713408
        %v1575 = vunpack.c.0.s8 %v1574
        %v1576 = vlaneseq
        %v1577 = vshrl.u32 %v1576, 7
        %v1578 = vsub.s32 %v1575, %v1577
        %v1579 = vrot.slane %v1565, %v1578
        %v1580 = vcombine.low %v1524, %v1540
        %v1581 = vcombine.high %v1524, %v1540
        %v1583 = vunpack.c.l.s4 1934713408
        %v1584 = vunpack.c.0.s8 %v1583
        %v1585 = vlaneseq
        %v1586 = vshrl.u32 %v1585, 7
        %v1587 = vsub.s32 %v1584, %v1586
        %v1588 = vrot.slane %v1580, %v1587
        %v1590 = vunpack.c.l.s4 1934713408
        %v1591 = vunpack.c.0.s8 %v1590
        %v1592 = vlaneseq
        %v1593 = vshrl.u32 %v1592, 7
        %v1594 = vsub.s32 %v1591, %v1593
        %v1595 = vrot.slane %v1581, %v1594
        %v1596 = vcombine.low %v1531, %v1547
        %v1597 = vcombine.high %v1531, %v1547
        %v1599 = vunpack.c.l.s4 1934713408
        %v1600 = vunpack.c.0.s8 %v1599
        %v1601 = vlaneseq
        %v1602 = vshrl.u32 %v1601, 7
        %v1603 = vsub.s32 %v1600, %v1602
        %v1604 = vrot.slane %v1596, %v1603
        %v1606 = vunpack.c.l.s4 1934713408
        %v1607 = vunpack.c.0.s8 %v1606
        %v1608 = vlaneseq
        %v1609 = vshrl.u32 %v1608, 7
        %v1610 = vsub.s32 %v1607, %v1609
        %v1611 = vrot.slane %v1597, %v1610
        %v1612 = vcombine.low %v1556, %v1588
        %v1613 = vcombine.high %v1556, %v1588
        %v1614 = vcombine.low %v1563, %v1595
        %v1615 = vcombine.high %v1563, %v1595
        %v1616 = vcombine.low %v1572, %v1604
        %v1617 = vcombine.high %v1572, %v1604
        %v1618 = vcombine.low %v1579, %v1611
        %v1619 = vcombine.high %v1579, %v1611
        %v1620 = vcombine.low %v154, %v349
        %v1621 = vcombine.high %v154, %v349
        %v1623 = vunpack.c.l.s4 1983009808
        %v1624 = vunpack.c.0.s8 %v1623
        %v1625 = vlaneseq
        %v1626 = vshrl.u32 %v1625, 7
        %v1627 = vsub.s32 %v1624, %v1626
        %v1628 = vrot.slane %v1620, %v1627
        %v1630 = vunpack.c.l.s4 1983009808
        %v1631 = vunpack.c.0.s8 %v1630
        %v1632 = vlaneseq
        %v1633 = vshrl.u32 %v1632, 7
        %v1634 = vsub.s32 %v1631, %v1633
        %v1635 = vrot.slane %v1621, %v1634
        %v1636 = vcombine.low %v346, %v352
        %v1637 = vcombine.high %v346, %v352
        %v1639 = vunpack.c.l.s4 1983009808
        %v1640 = vunpack.c.0.s8 %v1639
        %v1641 = vlaneseq
        %v1642 = vshrl.u32 %v1641, 7
        %v1643 = vsub.s32 %v1640, %v1642
        %v1644 = vrot.slane %v1636, %v1643
        %v1646 = vunpack.c.l.s4 1983009808
        %v1647 = vunpack.c.0.s8 %v1646
        %v1648 = vlaneseq
        %v1649 = vshrl.u32 %v1648, 7
        %v1650 = vsub.s32 %v1647, %v1649
        %v1651 = vrot.slane %v1637, %v1650
        %v1652 = vcombine.low %v355, %v361
        %v1653 = vcombine.high %v355, %v361
        %v1655 = vunpack.c.l.s4 1983009808
        %v1656 = vunpack.c.0.s8 %v1655
        %v1657 = vlaneseq
        %v1658 = vshrl.u32 %v1657, 7
        %v1659 = vsub.s32 %v1656, %v1658
        %v1660 = vrot.slane %v1652, %v1659
        %v1662 = vunpack.c.l.s4 1983009808
        %v1663 = vunpack.c.0.s8 %v1662
        %v1664 = vlaneseq
        %v1665 = vshrl.u32 %v1664, 7
        %v1666 = vsub.s32 %v1663, %v1665
        %v1667 = vrot.slane %v1653, %v1666
        %v1668 = vcombine.low %v358, %v364
        %v1669 = vcombine.high %v358, %v364
        %v1671 = vunpack.c.l.s4 1983009808
        %v1672 = vunpack.c.0.s8 %v1671
        %v1673 = vlaneseq
        %v1674 = vshrl.u32 %v1673, 7
        %v1675 = vsub.s32 %v1672, %v1674
        %v1676 = vrot.slane %v1668, %v1675
        %v1678 = vunpack.c.l.s4 1983009808
        %v1679 = vunpack.c.0.s8 %v1678
        %v1680 = vlaneseq
        %v1681 = vshrl.u32 %v1680, 7
        %v1682 = vsub.s32 %v1679, %v1681
        %v1683 = vrot.slane %v1669, %v1682
        %v1684 = vcombine.low %v1628, %v1644
        %v1685 = vcombine.high %v1628, %v1644
        %v1687 = vunpack.c.l.s4 1934713408
        %v1688 = vunpack.c.0.s8 %v1687
        %v1689 = vlaneseq
        %v1690 = vshrl.u32 %v1689, 7
        %v1691 = vsub.s32 %v1688, %v1690
        %v1692 = vrot.slane %v1684, %v1691
        %v1694 = vunpack.c.l.s4 1934713408
        %v1695 = vunpack.c.0.s8 %v1694
        %v1696 = vlaneseq
        %v1697 = vshrl.u32 %v1696, 7
        %v1698 = vsub.s32 %v1695, %v1697
        %v1699 = vrot.slane %v1685, %v1698
        %v1700 = vcombine.low %v1635, %v1651
        %v1701 = vcombine.high %v1635, %v1651
        %v1703 = vunpack.c.l.s4 1934713408
        %v1704 = vunpack.c.0.s8 %v1703
        %v1705 = vlaneseq
        %v1706 = vshrl.u32 %v1705, 7
        %v1707 = vsub.s32 %v1704, %v1706
        %v1708 = vrot.slane %v1700, %v1707
        %v1710 = vunpack.c.l.s4 1934713408
        %v1711 = vunpack.c.0.s8 %v1710
        %v1712 = vlaneseq
        %v1713 = vshrl.u32 %v1712, 7
        %v1714 = vsub.s32 %v1711, %v1713
        %v1715 = vrot.slane %v1701, %v1714
        %v1716 = vcombine.low %v1660, %v1676
        %v1717 = vcombine.high %v1660, %v1676
        %v1719 = vunpack.c.l.s4 1934713408
        %v1720 = vunpack.c.0.s8 %v1719
        %v1721 = vlaneseq
        %v1722 = vshrl.u32 %v1721, 7
        %v1723 = vsub.s32 %v1720, %v1722
        %v1724 = vrot.slane %v1716, %v1723
        %v1726 = vunpack.c.l.s4 1934713408
        %v1727 = vunpack.c.0.s8 %v1726
        %v1728 = vlaneseq
        %v1729 = vshrl.u32 %v1728, 7
        %v1730 = vsub.s32 %v1727, %v1729
        %v1731 = vrot.slane %v1717, %v1730
        %v1732 = vcombine.low %v1667, %v1683
        %v1733 = vcombine.high %v1667, %v1683
        %v1735 = vunpack.c.l.s4 1934713408
        %v1736 = vunpack.c.0.s8 %v1735
        %v1737 = vlaneseq
        %v1738 = vshrl.u32 %v1737, 7
        %v1739 = vsub.s32 %v1736, %v1738
        %v1740 = vrot.slane %v1732, %v1739
        %v1742 = vunpack.c.l.s4 1934713408
        %v1743 = vunpack.c.0.s8 %v1742
        %v1744 = vlaneseq
        %v1745 = vshrl.u32 %v1744, 7
        %v1746 = vsub.s32 %v1743, %v1745
        %v1747 = vrot.slane %v1733, %v1746
        %v1748 = vcombine.low %v1692, %v1724
        %v1749 = vcombine.high %v1692, %v1724
        %v1750 = vcombine.low %v1699, %v1731
        %v1751 = vcombine.high %v1699, %v1731
        %v1752 = vcombine.low %v1708, %v1740
        %v1753 = vcombine.high %v1708, %v1740
        %v1754 = vcombine.low %v1715, %v1747
        %v1755 = vcombine.high %v1715, %v1747
        %v1756 = vcombine.low %v367, %v373
        %v1757 = vcombine.high %v367, %v373
        %v1759 = vunpack.c.l.s4 1983009808
        %v1760 = vunpack.c.0.s8 %v1759
        %v1761 = vlaneseq
        %v1762 = vshrl.u32 %v1761, 7
        %v1763 = vsub.s32 %v1760, %v1762
        %v1764 = vrot.slane %v1756, %v1763
        %v1766 = vunpack.c.l.s4 1983009808
        %v1767 = vunpack.c.0.s8 %v1766
        %v1768 = vlaneseq
        %v1769 = vshrl.u32 %v1768, 7
        %v1770 = vsub.s32 %v1767, %v1769
        %v1771 = vrot.slane %v1757, %v1770
        %v1772 = vcombine.low %v370, %v376
        %v1773 = vcombine.high %v370, %v376
        %v1775 = vunpack.c.l.s4 1983009808
        %v1776 = vunpack.c.0.s8 %v1775
        %v1777 = vlaneseq
        %v1778 = vshrl.u32 %v1777, 7
        %v1779 = vsub.s32 %v1776, %v1778
        %v1780 = vrot.slane %v1772, %v1779
        %v1782 = vunpack.c.l.s4 1983009808
        %v1783 = vunpack.c.0.s8 %v1782
        %v1784 = vlaneseq
        %v1785 = vshrl.u32 %v1784, 7
        %v1786 = vsub.s32 %v1783, %v1785
        %v1787 = vrot.slane %v1773, %v1786
        %v1788 = vcombine.low %v379, %v385
        %v1789 = vcombine.high %v379, %v385
        %v1791 = vunpack.c.l.s4 1983009808
        %v1792 = vunpack.c.0.s8 %v1791
        %v1793 = vlaneseq
        %v1794 = vshrl.u32 %v1793, 7
        %v1795 = vsub.s32 %v1792, %v1794
        %v1796 = vrot.slane %v1788, %v1795
        %v1798 = vunpack.c.l.s4 1983009808
        %v1799 = vunpack.c.0.s8 %v1798
        %v1800 = vlaneseq
        %v1801 = vshrl.u32 %v1800, 7
        %v1802 = vsub.s32 %v1799, %v1801
        %v1803 = vrot.slane %v1789, %v1802
        %v1804 = vcombine.low %v382, %v388
        %v1805 = vcombine.high %v382, %v388
        %v1807 = vunpack.c.l.s4 1983009808
        %v1808 = vunpack.c.0.s8 %v1807
        %v1809 = vlaneseq
        %v1810 = vshrl.u32 %v1809, 7
        %v1811 = vsub.s32 %v1808, %v1810
        %v1812 = vrot.slane %v1804, %v1811
        %v1814 = vunpack.c.l.s4 1983009808
        %v1815 = vunpack.c.0.s8 %v1814
        %v1816 = vlaneseq
        %v1817 = vshrl.u32 %v1816, 7
        %v1818 = vsub.s32 %v1815, %v1817
        %v1819 = vrot.slane %v1805, %v1818
        %v1820 = vcombine.low %v1764, %v1780
        %v1821 = vcombine.high %v1764, %v1780
        %v1823 = vunpack.c.l.s4 1934713408
        %v1824 = vunpack.c.0.s8 %v1823
        %v1825 = vlaneseq
        %v1826 = vshrl.u32 %v1825, 7
        %v1827 = vsub.s32 %v1824, %v1826
        %v1828 = vrot.slane %v1820, %v1827
        %v1830 = vunpack.c.l.s4 1934713408
        %v1831 = vunpack.c.0.s8 %v1830
        %v1832 = vlaneseq
        %v1833 = vshrl.u32 %v1832, 7
        %v1834 = vsub.s32 %v1831, %v1833
        %v1835 = vrot.slane %v1821, %v1834
        %v1836 = vcombine.low %v1771, %v1787
        %v1837 = vcombine.high %v1771, %v1787
        %v1839 = vunpack.c.l.s4 1934713408
        %v1840 = vunpack.c.0.s8 %v1839
        %v1841 = vlaneseq
        %v1842 = vshrl.u32 %v1841, 7
        %v1843 = vsub.s32 %v1840, %v1842
        %v1844 = vrot.slane %v1836, %v1843
        %v1846 = vunpack.c.l.s4 1934713408
        %v1847 = vunpack.c.0.s8 %v1846
        %v1848 = vlaneseq
        %v1849 = vshrl.u32 %v1848, 7
        %v1850 = vsub.s32 %v1847, %v1849
        %v1851 = vrot.slane %v1837, %v1850
        %v1852 = vcombine.low %v1796, %v1812
        %v1853 = vcombine.high %v1796, %v1812
        %v1855 = vunpack.c.l.s4 1934713408
        %v1856 = vunpack.c.0.s8 %v1855
        %v1857 = vlaneseq
        %v1858 = vshrl.u32 %v1857, 7
        %v1859 = vsub.s32 %v1856, %v1858
        %v1860 = vrot.slane %v1852, %v1859
        %v1862 = vunpack.c.l.s4 1934713408
        %v1863 = vunpack.c.0.s8 %v1862
        %v1864 = vlaneseq
        %v1865 = vshrl.u32 %v1864, 7
        %v1866 = vsub.s32 %v1863, %v1865
        %v1867 = vrot.slane %v1853, %v1866
        %v1868 = vcombine.low %v1803, %v1819
        %v1869 = vcombine.high %v1803, %v1819
        %v1871 = vunpack.c.l.s4 1934713408
        %v1872 = vunpack.c.0.s8 %v1871
        %v1873 = vlaneseq
        %v1874 = vshrl.u32 %v1873, 7
        %v1875 = vsub.s32 %v1872, %v1874
        %v1876 = vrot.slane %v1868, %v1875
        %v1878 = vunpack.c.l.s4 1934713408
        %v1879 = vunpack.c.0.s8 %v1878
        %v1880 = vlaneseq
        %v1881 = vshrl.u32 %v1880, 7
        %v1882 = vsub.s32 %v1879, %v1881
        %v1883 = vrot.slane %v1869, %v1882
        %v1884 = vcombine.low %v1828, %v1860
        %v1885 = vcombine.high %v1828, %v1860
        %v1886 = vcombine.low %v1835, %v1867
        %v1887 = vcombine.high %v1835, %v1867
        %v1888 = vcombine.low %v1844, %v1876
        %v1889 = vcombine.high %v1844, %v1876
        %v1890 = vcombine.low %v1851, %v1883
        %v1891 = vcombine.high %v1851, %v1883
        %v1892 = vcombine.low %v391, %v397
        %v1893 = vcombine.high %v391, %v397
        %v1895 = vunpack.c.l.s4 1983009808
        %v1896 = vunpack.c.0.s8 %v1895
        %v1897 = vlaneseq
        %v1898 = vshrl.u32 %v1897, 7
        %v1899 = vsub.s32 %v1896, %v1898
        %v1900 = vrot.slane %v1892, %v1899
        %v1902 = vunpack.c.l.s4 1983009808
        %v1903 = vunpack.c.0.s8 %v1902
        %v1904 = vlaneseq
        %v1905 = vshrl.u32 %v1904, 7
        %v1906 = vsub.s32 %v1903, %v1905
        %v1907 = vrot.slane %v1893, %v1906
        %v1908 = vcombine.low %v394, %v400
        %v1909 = vcombine.high %v394, %v400
        %v1911 = vunpack.c.l.s4 1983009808
        %v1912 = vunpack.c.0.s8 %v1911
        %v1913 = vlaneseq
        %v1914 = vshrl.u32 %v1913, 7
        %v1915 = vsub.s32 %v1912, %v1914
        %v1916 = vrot.slane %v1908, %v1915
        %v1918 = vunpack.c.l.s4 1983009808
        %v1919 = vunpack.c.0.s8 %v1918
        %v1920 = vlaneseq
        %v1921 = vshrl.u32 %v1920, 7
        %v1922 = vsub.s32 %v1919, %v1921
        %v1923 = vrot.slane %v1909, %v1922
        %v1924 = vcombine.low %v403, %v409
        %v1925 = vcombine.high %v403, %v409
        %v1927 = vunpack.c.l.s4 1983009808
        %v1928 = vunpack.c.0.s8 %v1927
        %v1929 = vlaneseq
        %v1930 = vshrl.u32 %v1929, 7
        %v1931 = vsub.s32 %v1928, %v1930
        %v1932 = vrot.slane %v1924, %v1931
        %v1934 = vunpack.c.l.s4 1983009808
        %v1935 = vunpack.c.0.s8 %v1934
        %v1936 = vlaneseq
        %v1937 = vshrl.u32 %v1936, 7
        %v1938 = vsub.s32 %v1935, %v1937
        %v1939 = vrot.slane %v1925, %v1938
        %v1940 = vcombine.low %v406, %v412
        %v1941 = vcombine.high %v406, %v412
        %v1943 = vunpack.c.l.s4 1983009808
        %v1944 = vunpack.c.0.s8 %v1943
        %v1945 = vlaneseq
        %v1946 = vshrl.u32 %v1945, 7
        %v1947 = vsub.s32 %v1944, %v1946
        %v1948 = vrot.slane %v1940, %v1947
        %v1950 = vunpack.c.l.s4 1983009808
        %v1951 = vunpack.c.0.s8 %v1950
        %v1952 = vlaneseq
        %v1953 = vshrl.u32 %v1952, 7
        %v1954 = vsub.s32 %v1951, %v1953
        %v1955 = vrot.slane %v1941, %v1954
        %v1956 = vcombine.low %v1900, %v1916
        %v1957 = vcombine.high %v1900, %v1916
        %v1959 = vunpack.c.l.s4 1934713408
        %v1960 = vunpack.c.0.s8 %v1959
        %v1961 = vlaneseq
        %v1962 = vshrl.u32 %v1961, 7
        %v1963 = vsub.s32 %v1960, %v1962
        %v1964 = vrot.slane %v1956, %v1963
        %v1966 = vunpack.c.l.s4 1934713408
        %v1967 = vunpack.c.0.s8 %v1966
        %v1968 = vlaneseq
        %v1969 = vshrl.u32 %v1968, 7
        %v1970 = vsub.s32 %v1967, %v1969
        %v1971 = vrot.slane %v1957, %v1970
        %v1972 = vcombine.low %v1907, %v1923
        %v1973 = vcombine.high %v1907, %v1923
        %v1975 = vunpack.c.l.s4 1934713408
        %v1976 = vunpack.c.0.s8 %v1975
        %v1977 = vlaneseq
        %v1978 = vshrl.u32 %v1977, 7
        %v1979 = vsub.s32 %v1976, %v1978
        %v1980 = vrot.slane %v1972, %v1979
        %v1982 = vunpack.c.l.s4 1934713408
        %v1983 = vunpack.c.0.s8 %v1982
        %v1984 = vlaneseq
        %v1985 = vshrl.u32 %v1984, 7
        %v1986 = vsub.s32 %v1983, %v1985
        %v1987 = vrot.slane %v1973, %v1986
        %v1988 = vcombine.low %v1932, %v1948
        %v1989 = vcombine.high %v1932, %v1948
        %v1991 = vunpack.c.l.s4 1934713408
        %v1992 = vunpack.c.0.s8 %v1991
        %v1993 = vlaneseq
        %v1994 = vshrl.u32 %v1993, 7
        %v1995 = vsub.s32 %v1992, %v1994
        %v1996 = vrot.slane %v1988, %v1995
        %v1998 = vunpack.c.l.s4 1934713408
        %v1999 = vunpack.c.0.s8 %v1998
        %v2000 = vlaneseq
        %v2001 = vshrl.u32 %v2000, 7
        %v2002 = vsub.s32 %v1999, %v2001
        %v2003 = vrot.slane %v1989, %v2002
        %v2004 = vcombine.low %v1939, %v1955
        %v2005 = vcombine.high %v1939, %v1955
        %v2007 = vunpack.c.l.s4 1934713408
        %v2008 = vunpack.c.0.s8 %v2007
        %v2009 = vlaneseq
        %v2010 = vshrl.u32 %v2009, 7
        %v2011 = vsub.s32 %v2008, %v2010
        %v2012 = vrot.slane %v2004, %v2011
        %v2014 = vunpack.c.l.s4 1934713408
        %v2015 = vunpack.c.0.s8 %v2014
        %v2016 = vlaneseq
        %v2017 = vshrl.u32 %v2016, 7
        %v2018 = vsub.s32 %v2015, %v2017
        %v2019 = vrot.slane %v2005, %v2018
        %v2020 = vcombine.low %v1964, %v1996
        %v2021 = vcombine.high %v1964, %v1996
        %v2022 = vcombine.low %v1971, %v2003
        %v2023 = vcombine.high %v1971, %v2003
        %v2024 = vcombine.low %v1980, %v2012
        %v2025 = vcombine.high %v1980, %v2012
        %v2026 = vcombine.low %v1987, %v2019
        %v2027 = vcombine.high %v1987, %v2019
        %v2028 = vcombine.low %v415, %v421
        %v2029 = vcombine.high %v415, %v421
        %v2031 = vunpack.c.l.s4 1983009808
        %v2032 = vunpack.c.0.s8 %v2031
        %v2033 = vlaneseq
        %v2034 = vshrl.u32 %v2033, 7
        %v2035 = vsub.s32 %v2032, %v2034
        %v2036 = vrot.slane %v2028, %v2035
        %v2038 = vunpack.c.l.s4 1983009808
        %v2039 = vunpack.c.0.s8 %v2038
        %v2040 = vlaneseq
        %v2041 = vshrl.u32 %v2040, 7
        %v2042 = vsub.s32 %v2039, %v2041
        %v2043 = vrot.slane %v2029, %v2042
        %v2044 = vcombine.low %v418, %v424
        %v2045 = vcombine.high %v418, %v424
        %v2047 = vunpack.c.l.s4 1983009808
        %v2048 = vunpack.c.0.s8 %v2047
        %v2049 = vlaneseq
        %v2050 = vshrl.u32 %v2049, 7
        %v2051 = vsub.s32 %v2048, %v2050
        %v2052 = vrot.slane %v2044, %v2051
        %v2054 = vunpack.c.l.s4 1983009808
        %v2055 = vunpack.c.0.s8 %v2054
        %v2056 = vlaneseq
        %v2057 = vshrl.u32 %v2056, 7
        %v2058 = vsub.s32 %v2055, %v2057
        %v2059 = vrot.slane %v2045, %v2058
        %v2060 = vcombine.low %v427, %v433
        %v2061 = vcombine.high %v427, %v433
        %v2063 = vunpack.c.l.s4 1983009808
        %v2064 = vunpack.c.0.s8 %v2063
        %v2065 = vlaneseq
        %v2066 = vshrl.u32 %v2065, 7
        %v2067 = vsub.s32 %v2064, %v2066
        %v2068 = vrot.slane %v2060, %v2067
        %v2070 = vunpack.c.l.s4 1983009808
        %v2071 = vunpack.c.0.s8 %v2070
        %v2072 = vlaneseq
        %v2073 = vshrl.u32 %v2072, 7
        %v2074 = vsub.s32 %v2071, %v2073
        %v2075 = vrot.slane %v2061, %v2074
        %v2076 = vcombine.low %v430, %v436
        %v2077 = vcombine.high %v430, %v436
        %v2079 = vunpack.c.l.s4 1983009808
        %v2080 = vunpack.c.0.s8 %v2079
        %v2081 = vlaneseq
        %v2082 = vshrl.u32 %v2081, 7
        %v2083 = vsub.s32 %v2080, %v2082
        %v2084 = vrot.slane %v2076, %v2083
        %v2086 = vunpack.c.l.s4 1983009808
        %v2087 = vunpack.c.0.s8 %v2086
        %v2088 = vlaneseq
        %v2089 = vshrl.u32 %v2088, 7
        %v2090 = vsub.s32 %v2087, %v2089
        %v2091 = vrot.slane %v2077, %v2090
        %v2092 = vcombine.low %v2036, %v2052
        %v2093 = vcombine.high %v2036, %v2052
        %v2095 = vunpack.c.l.s4 1934713408
        %v2096 = vunpack.c.0.s8 %v2095
        %v2097 = vlaneseq
        %v2098 = vshrl.u32 %v2097, 7
        %v2099 = vsub.s32 %v2096, %v2098
        %v2100 = vrot.slane %v2092, %v2099
        %v2102 = vunpack.c.l.s4 1934713408
        %v2103 = vunpack.c.0.s8 %v2102
        %v2104 = vlaneseq
        %v2105 = vshrl.u32 %v2104, 7
        %v2106 = vsub.s32 %v2103, %v2105
        %v2107 = vrot.slane %v2093, %v2106
        %v2108 = vcombine.low %v2043, %v2059
        %v2109 = vcombine.high %v2043, %v2059
        %v2111 = vunpack.c.l.s4 1934713408
        %v2112 = vunpack.c.0.s8 %v2111
        %v2113 = vlaneseq
        %v2114 = vshrl.u32 %v2113, 7
        %v2115 = vsub.s32 %v2112, %v2114
        %v2116 = vrot.slane %v2108, %v2115
        %v2118 = vunpack.c.l.s4 1934713408
        %v2119 = vunpack.c.0.s8 %v2118
        %v2120 = vlaneseq
        %v2121 = vshrl.u32 %v2120, 7
        %v2122 = vsub.s32 %v2119, %v2121
        %v2123 = vrot.slane %v2109, %v2122
        %v2124 = vcombine.low %v2068, %v2084
        %v2125 = vcombine.high %v2068, %v2084
        %v2127 = vunpack.c.l.s4 1934713408
        %v2128 = vunpack.c.0.s8 %v2127
        %v2129 = vlaneseq
        %v2130 = vshrl.u32 %v2129, 7
        %v2131 = vsub.s32 %v2128, %v2130
        %v2132 = vrot.slane %v2124, %v2131
        %v2134 = vunpack.c.l.s4 1934713408
        %v2135 = vunpack.c.0.s8 %v2134
        %v2136 = vlaneseq
        %v2137 = vshrl.u32 %v2136, 7
        %v2138 = vsub.s32 %v2135, %v2137
        %v2139 = vrot.slane %v2125, %v2138
        %v2140 = vcombine.low %v2075, %v2091
        %v2141 = vcombine.high %v2075, %v2091
        %v2143 = vunpack.c.l.s4 1934713408
        %v2144 = vunpack.c.0.s8 %v2143
        %v2145 = vlaneseq
        %v2146 = vshrl.u32 %v2145, 7
        %v2147 = vsub.s32 %v2144, %v2146
        %v2148 = vrot.slane %v2140, %v2147
        %v2150 = vunpack.c.l.s4 1934713408
        %v2151 = vunpack.c.0.s8 %v2150
        %v2152 = vlaneseq
        %v2153 = vshrl.u32 %v2152, 7
        %v2154 = vsub.s32 %v2151, %v2153
        %v2155 = vrot.slane %v2141, %v2154
        %v2156 = vcombine.low %v2100, %v2132
        %v2157 = vcombine.high %v2100, %v2132
        %v2158 = vcombine.low %v2107, %v2139
        %v2159 = vcombine.high %v2107, %v2139
        %v2160 = vcombine.low %v2116, %v2148
        %v2161 = vcombine.high %v2116, %v2148
        %v2162 = vcombine.low %v2123, %v2155
        %v2163 = vcombine.high %v2123, %v2155
        %v2164 = vcombine.low %v155, %v443
        %v2165 = vcombine.high %v155, %v443
        %v2167 = vunpack.c.l.s4 1983009808
        %v2168 = vunpack.c.0.s8 %v2167
        %v2169 = vlaneseq
        %v2170 = vshrl.u32 %v2169, 7
        %v2171 = vsub.s32 %v2168, %v2170
        %v2172 = vrot.slane %v2164, %v2171
        %v2174 = vunpack.c.l.s4 1983009808
        %v2175 = vunpack.c.0.s8 %v2174
        %v2176 = vlaneseq
        %v2177 = vshrl.u32 %v2176, 7
        %v2178 = vsub.s32 %v2175, %v2177
        %v2179 = vrot.slane %v2165, %v2178
        %v2180 = vcombine.low %v440, %v446
        %v2181 = vcombine.high %v440, %v446
        %v2183 = vunpack.c.l.s4 1983009808
        %v2184 = vunpack.c.0.s8 %v2183
        %v2185 = vlaneseq
        %v2186 = vshrl.u32 %v2185, 7
        %v2187 = vsub.s32 %v2184, %v2186
        %v2188 = vrot.slane %v2180, %v2187
        %v2190 = vunpack.c.l.s4 1983009808
        %v2191 = vunpack.c.0.s8 %v2190
        %v2192 = vlaneseq
        %v2193 = vshrl.u32 %v2192, 7
        %v2194 = vsub.s32 %v2191, %v2193
        %v2195 = vrot.slane %v2181, %v2194
        %v2196 = vcombine.low %v449, %v455
        %v2197 = vcombine.high %v449, %v455
        %v2199 = vunpack.c.l.s4 1983009808
        %v2200 = vunpack.c.0.s8 %v2199
        %v2201 = vlaneseq
        %v2202 = vshrl.u32 %v2201, 7
        %v2203 = vsub.s32 %v2200, %v2202
        %v2204 = vrot.slane %v2196, %v2203
        %v2206 = vunpack.c.l.s4 1983009808
        %v2207 = vunpack.c.0.s8 %v2206
        %v2208 = vlaneseq
        %v2209 = vshrl.u32 %v2208, 7
        %v2210 = vsub.s32 %v2207, %v2209
        %v2211 = vrot.slane %v2197, %v2210
        %v2212 = vcombine.low %v452, %v458
        %v2213 = vcombine.high %v452, %v458
        %v2215 = vunpack.c.l.s4 1983009808
        %v2216 = vunpack.c.0.s8 %v2215
        %v2217 = vlaneseq
        %v2218 = vshrl.u32 %v2217, 7
        %v2219 = vsub.s32 %v2216, %v2218
        %v2220 = vrot.slane %v2212, %v2219
        %v2222 = vunpack.c.l.s4 1983009808
        %v2223 = vunpack.c.0.s8 %v2222
        %v2224 = vlaneseq
        %v2225 = vshrl.u32 %v2224, 7
        %v2226 = vsub.s32 %v2223, %v2225
        %v2227 = vrot.slane %v2213, %v2226
        %v2228 = vcombine.low %v2172, %v2188
        %v2229 = vcombine.high %v2172, %v2188
        %v2231 = vunpack.c.l.s4 1934713408
        %v2232 = vunpack.c.0.s8 %v2231
        %v2233 = vlaneseq
        %v2234 = vshrl.u32 %v2233, 7
        %v2235 = vsub.s32 %v2232, %v2234
        %v2236 = vrot.slane %v2228, %v2235
        %v2238 = vunpack.c.l.s4 1934713408
        %v2239 = vunpack.c.0.s8 %v2238
        %v2240 = vlaneseq
        %v2241 = vshrl.u32 %v2240, 7
        %v2242 = vsub.s32 %v2239, %v2241
        %v2243 = vrot.slane %v2229, %v2242
        %v2244 = vcombine.low %v2179, %v2195
        %v2245 = vcombine.high %v2179, %v2195
        %v2247 = vunpack.c.l.s4 1934713408
        %v2248 = vunpack.c.0.s8 %v2247
        %v2249 = vlaneseq
        %v2250 = vshrl.u32 %v2249, 7
        %v2251 = vsub.s32 %v2248, %v2250
        %v2252 = vrot.slane %v2244, %v2251
        %v2254 = vunpack.c.l.s4 1934713408
        %v2255 = vunpack.c.0.s8 %v2254
        %v2256 = vlaneseq
        %v2257 = vshrl.u32 %v2256, 7
        %v2258 = vsub.s32 %v2255, %v2257
        %v2259 = vrot.slane %v2245, %v2258
        %v2260 = vcombine.low %v2204, %v2220
        %v2261 = vcombine.high %v2204, %v2220
        %v2263 = vunpack.c.l.s4 1934713408
        %v2264 = vunpack.c.0.s8 %v2263
        %v2265 = vlaneseq
        %v2266 = vshrl.u32 %v2265, 7
        %v2267 = vsub.s32 %v2264, %v2266
        %v2268 = vrot.slane %v2260, %v2267
        %v2270 = vunpack.c.l.s4 1934713408
        %v2271 = vunpack.c.0.s8 %v2270
        %v2272 = vlaneseq
        %v2273 = vshrl.u32 %v2272, 7
        %v2274 = vsub.s32 %v2271, %v2273
        %v2275 = vrot.slane %v2261, %v2274
        %v2276 = vcombine.low %v2211, %v2227
        %v2277 = vcombine.high %v2211, %v2227
        %v2279 = vunpack.c.l.s4 1934713408
        %v2280 = vunpack.c.0.s8 %v2279
        %v2281 = vlaneseq
        %v2282 = vshrl.u32 %v2281, 7
        %v2283 = vsub.s32 %v2280, %v2282
        %v2284 = vrot.slane %v2276, %v2283
        %v2286 = vunpack.c.l.s4 1934713408
        %v2287 = vunpack.c.0.s8 %v2286
        %v2288 = vlaneseq
        %v2289 = vshrl.u32 %v2288, 7
        %v2290 = vsub.s32 %v2287, %v2289
        %v2291 = vrot.slane %v2277, %v2290
        %v2292 = vcombine.low %v2236, %v2268
        %v2293 = vcombine.high %v2236, %v2268
        %v2294 = vcombine.low %v2243, %v2275
        %v2295 = vcombine.high %v2243, %v2275
        %v2296 = vcombine.low %v2252, %v2284
        %v2297 = vcombine.high %v2252, %v2284
        %v2298 = vcombine.low %v2259, %v2291
        %v2299 = vcombine.high %v2259, %v2291
        %v2300 = vcombine.low %v461, %v467
        %v2301 = vcombine.high %v461, %v467
        %v2303 = vunpack.c.l.s4 1983009808
        %v2304 = vunpack.c.0.s8 %v2303
        %v2305 = vlaneseq
        %v2306 = vshrl.u32 %v2305, 7
        %v2307 = vsub.s32 %v2304, %v2306
        %v2308 = vrot.slane %v2300, %v2307
        %v2310 = vunpack.c.l.s4 1983009808
        %v2311 = vunpack.c.0.s8 %v2310
        %v2312 = vlaneseq
        %v2313 = vshrl.u32 %v2312, 7
        %v2314 = vsub.s32 %v2311, %v2313
        %v2315 = vrot.slane %v2301, %v2314
        %v2316 = vcombine.low %v464, %v470
        %v2317 = vcombine.high %v464, %v470
        %v2319 = vunpack.c.l.s4 1983009808
        %v2320 = vunpack.c.0.s8 %v2319
        %v2321 = vlaneseq
        %v2322 = vshrl.u32 %v2321, 7
        %v2323 = vsub.s32 %v2320, %v2322
        %v2324 = vrot.slane %v2316, %v2323
        %v2326 = vunpack.c.l.s4 1983009808
        %v2327 = vunpack.c.0.s8 %v2326
        %v2328 = vlaneseq
        %v2329 = vshrl.u32 %v2328, 7
        %v2330 = vsub.s32 %v2327, %v2329
        %v2331 = vrot.slane %v2317, %v2330
        %v2332 = vcombine.low %v473, %v479
        %v2333 = vcombine.high %v473, %v479
        %v2335 = vunpack.c.l.s4 1983009808
        %v2336 = vunpack.c.0.s8 %v2335
        %v2337 = vlaneseq
        %v2338 = vshrl.u32 %v2337, 7
        %v2339 = vsub.s32 %v2336, %v2338
        %v2340 = vrot.slane %v2332, %v2339
        %v2342 = vunpack.c.l.s4 1983009808
        %v2343 = vunpack.c.0.s8 %v2342
        %v2344 = vlaneseq
        %v2345 = vshrl.u32 %v2344, 7
        %v2346 = vsub.s32 %v2343, %v2345
        %v2347 = vrot.slane %v2333, %v2346
        %v2348 = vcombine.low %v476, %v482
        %v2349 = vcombine.high %v476, %v482
        %v2351 = vunpack.c.l.s4 1983009808
        %v2352 = vunpack.c.0.s8 %v2351
        %v2353 = vlaneseq
        %v2354 = vshrl.u32 %v2353, 7
        %v2355 = vsub.s32 %v2352, %v2354
        %v2356 = vrot.slane %v2348, %v2355
        %v2358 = vunpack.c.l.s4 1983009808
        %v2359 = vunpack.c.0.s8 %v2358
        %v2360 = vlaneseq
        %v2361 = vshrl.u32 %v2360, 7
        %v2362 = vsub.s32 %v2359, %v2361
        %v2363 = vrot.slane %v2349, %v2362
        %v2364 = vcombine.low %v2308, %v2324
        %v2365 = vcombine.high %v2308, %v2324
        %v2367 = vunpack.c.l.s4 1934713408
        %v2368 = vunpack.c.0.s8 %v2367
        %v2369 = vlaneseq
        %v2370 = vshrl.u32 %v2369, 7
        %v2371 = vsub.s32 %v2368, %v2370
        %v2372 = vrot.slane %v2364, %v2371
        %v2374 = vunpack.c.l.s4 1934713408
        %v2375 = vunpack.c.0.s8 %v2374
        %v2376 = vlaneseq
        %v2377 = vshrl.u32 %v2376, 7
        %v2378 = vsub.s32 %v2375, %v2377
        %v2379 = vrot.slane %v2365, %v2378
        %v2380 = vcombine.low %v2315, %v2331
        %v2381 = vcombine.high %v2315, %v2331
        %v2383 = vunpack.c.l.s4 1934713408
        %v2384 = vunpack.c.0.s8 %v2383
        %v2385 = vlaneseq
        %v2386 = vshrl.u32 %v2385, 7
        %v2387 = vsub.s32 %v2384, %v2386
        %v2388 = vrot.slane %v2380, %v2387
        %v2390 = vunpack.c.l.s4 1934713408
        %v2391 = vunpack.c.0.s8 %v2390
        %v2392 = vlaneseq
        %v2393 = vshrl.u32 %v2392, 7
        %v2394 = vsub.s32 %v2391, %v2393
        %v2395 = vrot.slane %v2381, %v2394
        %v2396 = vcombine.low %v2340, %v2356
        %v2397 = vcombine.high %v2340, %v2356
        %v2399 = vunpack.c.l.s4 1934713408
        %v2400 = vunpack.c.0.s8 %v2399
        %v2401 = vlaneseq
        %v2402 = vshrl.u32 %v2401, 7
        %v2403 = vsub.s32 %v2400, %v2402
        %v2404 = vrot.slane %v2396, %v2403
        %v2406 = vunpack.c.l.s4 1934713408
        %v2407 = vunpack.c.0.s8 %v2406
        %v2408 = vlaneseq
        %v2409 = vshrl.u32 %v2408, 7
        %v2410 = vsub.s32 %v2407, %v2409
        %v2411 = vrot.slane %v2397, %v2410
        %v2412 = vcombine.low %v2347, %v2363
        %v2413 = vcombine.high %v2347, %v2363
        %v2415 = vunpack.c.l.s4 1934713408
        %v2416 = vunpack.c.0.s8 %v2415
        %v2417 = vlaneseq
        %v2418 = vshrl.u32 %v2417, 7
        %v2419 = vsub.s32 %v2416, %v2418
        %v2420 = vrot.slane %v2412, %v2419
        %v2422 = vunpack.c.l.s4 1934713408
        %v2423 = vunpack.c.0.s8 %v2422
        %v2424 = vlaneseq
        %v2425 = vshrl.u32 %v2424, 7
        %v2426 = vsub.s32 %v2423, %v2425
        %v2427 = vrot.slane %v2413, %v2426
        %v2428 = vcombine.low %v2372, %v2404
        %v2429 = vcombine.high %v2372, %v2404
        %v2430 = vcombine.low %v2379, %v2411
        %v2431 = vcombine.high %v2379, %v2411
        %v2432 = vcombine.low %v2388, %v2420
        %v2433 = vcombine.high %v2388, %v2420
        %v2434 = vcombine.low %v2395, %v2427
        %v2435 = vcombine.high %v2395, %v2427
        %v2436 = vcombine.low %v485, %v491
        %v2437 = vcombine.high %v485, %v491
        %v2439 = vunpack.c.l.s4 1983009808
        %v2440 = vunpack.c.0.s8 %v2439
        %v2441 = vlaneseq
        %v2442 = vshrl.u32 %v2441, 7
        %v2443 = vsub.s32 %v2440, %v2442
        %v2444 = vrot.slane %v2436, %v2443
        %v2446 = vunpack.c.l.s4 1983009808
        %v2447 = vunpack.c.0.s8 %v2446
        %v2448 = vlaneseq
        %v2449 = vshrl.u32 %v2448, 7
        %v2450 = vsub.s32 %v2447, %v2449
        %v2451 = vrot.slane %v2437, %v2450
        %v2452 = vcombine.low %v488, %v494
        %v2453 = vcombine.high %v488, %v494
        %v2455 = vunpack.c.l.s4 1983009808
        %v2456 = vunpack.c.0.s8 %v2455
        %v2457 = vlaneseq
        %v2458 = vshrl.u32 %v2457, 7
        %v2459 = vsub.s32 %v2456, %v2458
        %v2460 = vrot.slane %v2452, %v2459
        %v2462 = vunpack.c.l.s4 1983009808
        %v2463 = vunpack.c.0.s8 %v2462
        %v2464 = vlaneseq
        %v2465 = vshrl.u32 %v2464, 7
        %v2466 = vsub.s32 %v2463, %v2465
        %v2467 = vrot.slane %v2453, %v2466
        %v2468 = vcombine.low %v497, %v503
        %v2469 = vcombine.high %v497, %v503
        %v2471 = vunpack.c.l.s4 1983009808
        %v2472 = vunpack.c.0.s8 %v2471
        %v2473 = vlaneseq
        %v2474 = vshrl.u32 %v2473, 7
        %v2475 = vsub.s32 %v2472, %v2474
        %v2476 = vrot.slane %v2468, %v2475
        %v2478 = vunpack.c.l.s4 1983009808
        %v2479 = vunpack.c.0.s8 %v2478
        %v2480 = vlaneseq
        %v2481 = vshrl.u32 %v2480, 7
        %v2482 = vsub.s32 %v2479, %v2481
        %v2483 = vrot.slane %v2469, %v2482
        %v2484 = vcombine.low %v500, %v506
        %v2485 = vcombine.high %v500, %v506
        %v2487 = vunpack.c.l.s4 1983009808
        %v2488 = vunpack.c.0.s8 %v2487
        %v2489 = vlaneseq
        %v2490 = vshrl.u32 %v2489, 7
        %v2491 = vsub.s32 %v2488, %v2490
        %v2492 = vrot.slane %v2484, %v2491
        %v2494 = vunpack.c.l.s4 1983009808
        %v2495 = vunpack.c.0.s8 %v2494
        %v2496 = vlaneseq
        %v2497 = vshrl.u32 %v2496, 7
        %v2498 = vsub.s32 %v2495, %v2497
        %v2499 = vrot.slane %v2485, %v2498
        %v2500 = vcombine.low %v2444, %v2460
        %v2501 = vcombine.high %v2444, %v2460
        %v2503 = vunpack.c.l.s4 1934713408
        %v2504 = vunpack.c.0.s8 %v2503
        %v2505 = vlaneseq
        %v2506 = vshrl.u32 %v2505, 7
        %v2507 = vsub.s32 %v2504, %v2506
        %v2508 = vrot.slane %v2500, %v2507
        %v2510 = vunpack.c.l.s4 1934713408
        %v2511 = vunpack.c.0.s8 %v2510
        %v2512 = vlaneseq
        %v2513 = vshrl.u32 %v2512, 7
        %v2514 = vsub.s32 %v2511, %v2513
        %v2515 = vrot.slane %v2501, %v2514
        %v2516 = vcombine.low %v2451, %v2467
        %v2517 = vcombine.high %v2451, %v2467
        %v2519 = vunpack.c.l.s4 1934713408
        %v2520 = vunpack.c.0.s8 %v2519
        %v2521 = vlaneseq
        %v2522 = vshrl.u32 %v2521, 7
        %v2523 = vsub.s32 %v2520, %v2522
        %v2524 = vrot.slane %v2516, %v2523
        %v2526 = vunpack.c.l.s4 1934713408
        %v2527 = vunpack.c.0.s8 %v2526
        %v2528 = vlaneseq
        %v2529 = vshrl.u32 %v2528, 7
        %v2530 = vsub.s32 %v2527, %v2529
        %v2531 = vrot.slane %v2517, %v2530
        %v2532 = vcombine.low %v2476, %v2492
        %v2533 = vcombine.high %v2476, %v2492
        %v2535 = vunpack.c.l.s4 1934713408
        %v2536 = vunpack.c.0.s8 %v2535
        %v2537 = vlaneseq
        %v2538 = vshrl.u32 %v2537, 7
        %v2539 = vsub.s32 %v2536, %v2538
        %v2540 = vrot.slane %v2532, %v2539
        %v2542 = vunpack.c.l.s4 1934713408
        %v2543 = vunpack.c.0.s8 %v2542
        %v2544 = vlaneseq
        %v2545 = vshrl.u32 %v2544, 7
        %v2546 = vsub.s32 %v2543, %v2545
        %v2547 = vrot.slane %v2533, %v2546
        %v2548 = vcombine.low %v2483, %v2499
        %v2549 = vcombine.high %v2483, %v2499
        %v2551 = vunpack.c.l.s4 1934713408
        %v2552 = vunpack.c.0.s8 %v2551
        %v2553 = vlaneseq
        %v2554 = vshrl.u32 %v2553, 7
        %v2555 = vsub.s32 %v2552, %v2554
        %v2556 = vrot.slane %v2548, %v2555
        %v2558 = vunpack.c.l.s4 1934713408
        %v2559 = vunpack.c.0.s8 %v2558
        %v2560 = vlaneseq
        %v2561 = vshrl.u32 %v2560, 7
        %v2562 = vsub.s32 %v2559, %v2561
        %v2563 = vrot.slane %v2549, %v2562
        %v2564 = vcombine.low %v2508, %v2540
        %v2565 = vcombine.high %v2508, %v2540
        %v2566 = vcombine.low %v2515, %v2547
        %v2567 = vcombine.high %v2515, %v2547
        %v2568 = vcombine.low %v2524, %v2556
        %v2569 = vcombine.high %v2524, %v2556
        %v2570 = vcombine.low %v2531, %v2563
        %v2571 = vcombine.high %v2531, %v2563
        %v2572 = vcombine.low %v509, %v515
        %v2573 = vcombine.high %v509, %v515
        %v2575 = vunpack.c.l.s4 1983009808
        %v2576 = vunpack.c.0.s8 %v2575
        %v2577 = vlaneseq
        %v2578 = vshrl.u32 %v2577, 7
        %v2579 = vsub.s32 %v2576, %v2578
        %v2580 = vrot.slane %v2572, %v2579
        %v2582 = vunpack.c.l.s4 1983009808
        %v2583 = vunpack.c.0.s8 %v2582
        %v2584 = vlaneseq
        %v2585 = vshrl.u32 %v2584, 7
        %v2586 = vsub.s32 %v2583, %v2585
        %v2587 = vrot.slane %v2573, %v2586
        %v2588 = vcombine.low %v512, %v518
        %v2589 = vcombine.high %v512, %v518
        %v2591 = vunpack.c.l.s4 1983009808
        %v2592 = vunpack.c.0.s8 %v2591
        %v2593 = vlaneseq
        %v2594 = vshrl.u32 %v2593, 7
        %v2595 = vsub.s32 %v2592, %v2594
        %v2596 = vrot.slane %v2588, %v2595
        %v2598 = vunpack.c.l.s4 1983009808
        %v2599 = vunpack.c.0.s8 %v2598
        %v2600 = vlaneseq
        %v2601 = vshrl.u32 %v2600, 7
        %v2602 = vsub.s32 %v2599, %v2601
        %v2603 = vrot.slane %v2589, %v2602
        %v2604 = vcombine.low %v521, %v527
        %v2605 = vcombine.high %v521, %v527
        %v2607 = vunpack.c.l.s4 1983009808
        %v2608 = vunpack.c.0.s8 %v2607
        %v2609 = vlaneseq
        %v2610 = vshrl.u32 %v2609, 7
        %v2611 = vsub.s32 %v2608, %v2610
        %v2612 = vrot.slane %v2604, %v2611
        %v2614 = vunpack.c.l.s4 1983009808
        %v2615 = vunpack.c.0.s8 %v2614
        %v2616 = vlaneseq
        %v2617 = vshrl.u32 %v2616, 7
        %v2618 = vsub.s32 %v2615, %v2617
        %v2619 = vrot.slane %v2605, %v2618
        %v2620 = vcombine.low %v524, %v530
        %v2621 = vcombine.high %v524, %v530
        %v2623 = vunpack.c.l.s4 1983009808
        %v2624 = vunpack.c.0.s8 %v2623
        %v2625 = vlaneseq
        %v2626 = vshrl.u32 %v2625, 7
        %v2627 = vsub.s32 %v2624, %v2626
        %v2628 = vrot.slane %v2620, %v2627
        %v2630 = vunpack.c.l.s4 1983009808
        %v2631 = vunpack.c.0.s8 %v2630
        %v2632 = vlaneseq
        %v2633 = vshrl.u32 %v2632, 7
        %v2634 = vsub.s32 %v2631, %v2633
        %v2635 = vrot.slane %v2621, %v2634
        %v2636 = vcombine.low %v2580, %v2596
        %v2637 = vcombine.high %v2580, %v2596
        %v2639 = vunpack.c.l.s4 1934713408
        %v2640 = vunpack.c.0.s8 %v2639
        %v2641 = vlaneseq
        %v2642 = vshrl.u32 %v2641, 7
        %v2643 = vsub.s32 %v2640, %v2642
        %v2644 = vrot.slane %v2636, %v2643
        %v2646 = vunpack.c.l.s4 1934713408
        %v2647 = vunpack.c.0.s8 %v2646
        %v2648 = vlaneseq
        %v2649 = vshrl.u32 %v2648, 7
        %v2650 = vsub.s32 %v2647, %v2649
        %v2651 = vrot.slane %v2637, %v2650
        %v2652 = vcombine.low %v2587, %v2603
        %v2653 = vcombine.high %v2587, %v2603
        %v2655 = vunpack.c.l.s4 1934713408
        %v2656 = vunpack.c.0.s8 %v2655
        %v2657 = vlaneseq
        %v2658 = vshrl.u32 %v2657, 7
        %v2659 = vsub.s32 %v2656, %v2658
        %v2660 = vrot.slane %v2652, %v2659
        %v2662 = vunpack.c.l.s4 1934713408
        %v2663 = vunpack.c.0.s8 %v2662
        %v2664 = vlaneseq
        %v2665 = vshrl.u32 %v2664, 7
        %v2666 = vsub.s32 %v2663, %v2665
        %v2667 = vrot.slane %v2653, %v2666
        %v2668 = vcombine.low %v2612, %v2628
        %v2669 = vcombine.high %v2612, %v2628
        %v2671 = vunpack.c.l.s4 1934713408
        %v2672 = vunpack.c.0.s8 %v2671
        %v2673 = vlaneseq
        %v2674 = vshrl.u32 %v2673, 7
        %v2675 = vsub.s32 %v2672, %v2674
        %v2676 = vrot.slane %v2668, %v2675
        %v2678 = vunpack.c.l.s4 1934713408
        %v2679 = vunpack.c.0.s8 %v2678
        %v2680 = vlaneseq
        %v2681 = vshrl.u32 %v2680, 7
        %v2682 = vsub.s32 %v2679, %v2681
        %v2683 = vrot.slane %v2669, %v2682
        %v2684 = vcombine.low %v2619, %v2635
        %v2685 = vcombine.high %v2619, %v2635
        %v2687 = vunpack.c.l.s4 1934713408
        %v2688 = vunpack.c.0.s8 %v2687
        %v2689 = vlaneseq
        %v2690 = vshrl.u32 %v2689, 7
        %v2691 = vsub.s32 %v2688, %v2690
        %v2692 = vrot.slane %v2684, %v2691
        %v2694 = vunpack.c.l.s4 1934713408
        %v2695 = vunpack.c.0.s8 %v2694
        %v2696 = vlaneseq
        %v2697 = vshrl.u32 %v2696, 7
        %v2698 = vsub.s32 %v2695, %v2697
        %v2699 = vrot.slane %v2685, %v2698
        %v2700 = vcombine.low %v2644, %v2676
        %v2701 = vcombine.high %v2644, %v2676
        %v2702 = vcombine.low %v2651, %v2683
        %v2703 = vcombine.high %v2651, %v2683
        %v2704 = vcombine.low %v2660, %v2692
        %v2705 = vcombine.high %v2660, %v2692
        %v2706 = vcombine.low %v2667, %v2699
        %v2707 = vcombine.high %v2667, %v2699
        %vm2708 = vcmask 31744
        %v2709 = vsel %vm2708, %v660, -inf
        %2710 = vmax.xlane.f32.xlu0 %v2709
        %v2711 = vpop.xlane.xlu0 %2710
        %v2712 = vsel %vm2708, %v796, -inf
        %2713 = vmax.xlane.f32.xlu0 %v2712
        %v2714 = vpop.xlane.xlu0 %2713
        %v2715 = vsel %vm2708, %v932, -inf
        %2716 = vmax.xlane.f32.xlu0 %v2715
        %v2717 = vpop.xlane.xlu0 %2716
        %v2718 = vsel %vm2708, %v1068, -inf
        %2719 = vmax.xlane.f32.xlu0 %v2718
        %v2720 = vpop.xlane.xlu0 %2719
        %v2721 = vsel %vm2708, %v1204, -inf
        %2722 = vmax.xlane.f32.xlu0 %v2721
        %v2723 = vpop.xlane.xlu0 %2722
        %v2724 = vsel %vm2708, %v1340, -inf
        %2725 = vmax.xlane.f32.xlu0 %v2724
        %v2726 = vpop.xlane.xlu0 %2725
        %v2727 = vsel %vm2708, %v1476, -inf
        %2728 = vmax.xlane.f32.xlu0 %v2727
        %v2729 = vpop.xlane.xlu0 %2728
        %v2730 = vsel %vm2708, %v1612, -inf
        %2731 = vmax.xlane.f32.xlu0 %v2730
        %v2732 = vpop.xlane.xlu0 %2731
        %v2733 = vsel %vm2708, %v1748, -inf
        %2734 = vmax.xlane.f32.xlu0 %v2733
        %v2735 = vpop.xlane.xlu0 %2734
        %v2736 = vsel %vm2708, %v1884, -inf
        %2737 = vmax.xlane.f32.xlu0 %v2736
        %v2738 = vpop.xlane.xlu0 %2737
        %v2739 = vsel %vm2708, %v2020, -inf
        %2740 = vmax.xlane.f32.xlu0 %v2739
        %v2741 = vpop.xlane.xlu0 %2740
        %v2742 = vsel %vm2708, %v2156, -inf
        %2743 = vmax.xlane.f32.xlu0 %v2742
        %v2744 = vpop.xlane.xlu0 %2743
        %v2745 = vsel %vm2708, %v2292, -inf
        %2746 = vmax.xlane.f32.xlu0 %v2745
        %v2747 = vpop.xlane.xlu0 %2746
        %v2748 = vsel %vm2708, %v2428, -inf
        %2749 = vmax.xlane.f32.xlu0 %v2748
        %v2750 = vpop.xlane.xlu0 %2749
        %v2751 = vsel %vm2708, %v2564, -inf
        %2752 = vmax.xlane.f32.xlu0 %v2751
        %v2753 = vpop.xlane.xlu0 %2752
        %v2754 = vsel %vm2708, %v2700, -inf
        %2755 = vmax.xlane.f32.xlu0 %v2754
        %v2756 = vpop.xlane.xlu0 %2755
        %v2757 = vsel %vm2708, %v661, -inf
        %2758 = vmax.xlane.f32.xlu0 %v2757
        %v2759 = vpop.xlane.xlu0 %2758
        %v2760 = vsel %vm2708, %v797, -inf
        %2761 = vmax.xlane.f32.xlu0 %v2760
        %v2762 = vpop.xlane.xlu0 %2761
        %v2763 = vsel %vm2708, %v933, -inf
        %2764 = vmax.xlane.f32.xlu0 %v2763
        %v2765 = vpop.xlane.xlu0 %2764
        %v2766 = vsel %vm2708, %v1069, -inf
        %2767 = vmax.xlane.f32.xlu0 %v2766
        %v2768 = vpop.xlane.xlu0 %2767
        %v2769 = vsel %vm2708, %v1205, -inf
        %2770 = vmax.xlane.f32.xlu0 %v2769
        %v2771 = vpop.xlane.xlu0 %2770
        %v2772 = vsel %vm2708, %v1341, -inf
        %2773 = vmax.xlane.f32.xlu0 %v2772
        %v2774 = vpop.xlane.xlu0 %2773
        %v2775 = vsel %vm2708, %v1477, -inf
        %2776 = vmax.xlane.f32.xlu0 %v2775
        %v2777 = vpop.xlane.xlu0 %2776
        %v2778 = vsel %vm2708, %v1613, -inf
        %2779 = vmax.xlane.f32.xlu0 %v2778
        %v2780 = vpop.xlane.xlu0 %2779
        %v2781 = vsel %vm2708, %v1749, -inf
        %2782 = vmax.xlane.f32.xlu0 %v2781
        %v2783 = vpop.xlane.xlu0 %2782
        %v2784 = vsel %vm2708, %v1885, -inf
        %2785 = vmax.xlane.f32.xlu0 %v2784
        %v2786 = vpop.xlane.xlu0 %2785
        %v2787 = vsel %vm2708, %v2021, -inf
        %2788 = vmax.xlane.f32.xlu0 %v2787
        %v2789 = vpop.xlane.xlu0 %2788
        %v2790 = vsel %vm2708, %v2157, -inf
        %2791 = vmax.xlane.f32.xlu0 %v2790
        %v2792 = vpop.xlane.xlu0 %2791
        %v2793 = vsel %vm2708, %v2293, -inf
        %2794 = vmax.xlane.f32.xlu0 %v2793
        %v2795 = vpop.xlane.xlu0 %2794
        %v2796 = vsel %vm2708, %v2429, -inf
        %2797 = vmax.xlane.f32.xlu0 %v2796
        %v2798 = vpop.xlane.xlu0 %2797
        %v2799 = vsel %vm2708, %v2565, -inf
        %2800 = vmax.xlane.f32.xlu0 %v2799
        %v2801 = vpop.xlane.xlu0 %2800
        %v2802 = vsel %vm2708, %v2701, -inf
        %2803 = vmax.xlane.f32.xlu0 %v2802
        %v2804 = vpop.xlane.xlu0 %2803
        %v2805 = vsel %vm2708, %v662, -inf
        %2806 = vmax.xlane.f32.xlu0 %v2805
        %v2807 = vpop.xlane.xlu0 %2806
        %v2808 = vsel %vm2708, %v798, -inf
        %2809 = vmax.xlane.f32.xlu0 %v2808
        %v2810 = vpop.xlane.xlu0 %2809
        %v2811 = vsel %vm2708, %v934, -inf
        %2812 = vmax.xlane.f32.xlu0 %v2811
        %v2813 = vpop.xlane.xlu0 %2812
        %v2814 = vsel %vm2708, %v1070, -inf
        %2815 = vmax.xlane.f32.xlu0 %v2814
        %v2816 = vpop.xlane.xlu0 %2815
        %v2817 = vsel %vm2708, %v1206, -inf
        %2818 = vmax.xlane.f32.xlu0 %v2817
        %v2819 = vpop.xlane.xlu0 %2818
        %v2820 = vsel %vm2708, %v1342, -inf
        %2821 = vmax.xlane.f32.xlu0 %v2820
        %v2822 = vpop.xlane.xlu0 %2821
        %v2823 = vsel %vm2708, %v1478, -inf
        %2824 = vmax.xlane.f32.xlu0 %v2823
        %v2825 = vpop.xlane.xlu0 %2824
        %v2826 = vsel %vm2708, %v1614, -inf
        %2827 = vmax.xlane.f32.xlu0 %v2826
        %v2828 = vpop.xlane.xlu0 %2827
        %v2829 = vsel %vm2708, %v1750, -inf
        %2830 = vmax.xlane.f32.xlu0 %v2829
        %v2831 = vpop.xlane.xlu0 %2830
        %v2832 = vsel %vm2708, %v1886, -inf
        %2833 = vmax.xlane.f32.xlu0 %v2832
        %v2834 = vpop.xlane.xlu0 %2833
        %v2835 = vsel %vm2708, %v2022, -inf
        %2836 = vmax.xlane.f32.xlu0 %v2835
        %v2837 = vpop.xlane.xlu0 %2836
        %v2838 = vsel %vm2708, %v2158, -inf
        %2839 = vmax.xlane.f32.xlu0 %v2838
        %v2840 = vpop.xlane.xlu0 %2839
        %v2841 = vsel %vm2708, %v2294, -inf
        %2842 = vmax.xlane.f32.xlu0 %v2841
        %v2843 = vpop.xlane.xlu0 %2842
        %v2844 = vsel %vm2708, %v2430, -inf
        %2845 = vmax.xlane.f32.xlu0 %v2844
        %v2846 = vpop.xlane.xlu0 %2845
        %v2847 = vsel %vm2708, %v2566, -inf
        %2848 = vmax.xlane.f32.xlu0 %v2847
        %v2849 = vpop.xlane.xlu0 %2848
        %v2850 = vsel %vm2708, %v2702, -inf
        %2851 = vmax.xlane.f32.xlu0 %v2850
        %v2852 = vpop.xlane.xlu0 %2851
        %v2853 = vsel %vm2708, %v663, -inf
        %2854 = vmax.xlane.f32.xlu0 %v2853
        %v2855 = vpop.xlane.xlu0 %2854
        %v2856 = vsel %vm2708, %v799, -inf
        %2857 = vmax.xlane.f32.xlu0 %v2856
        %v2858 = vpop.xlane.xlu0 %2857
        %v2859 = vsel %vm2708, %v935, -inf
        %2860 = vmax.xlane.f32.xlu0 %v2859
        %v2861 = vpop.xlane.xlu0 %2860
        %v2862 = vsel %vm2708, %v1071, -inf
        %2863 = vmax.xlane.f32.xlu0 %v2862
        %v2864 = vpop.xlane.xlu0 %2863
        %v2865 = vsel %vm2708, %v1207, -inf
        %2866 = vmax.xlane.f32.xlu0 %v2865
        %v2867 = vpop.xlane.xlu0 %2866
        %v2868 = vsel %vm2708, %v1343, -inf
        %2869 = vmax.xlane.f32.xlu0 %v2868
        %v2870 = vpop.xlane.xlu0 %2869
        %v2871 = vsel %vm2708, %v1479, -inf
        %2872 = vmax.xlane.f32.xlu0 %v2871
        %v2873 = vpop.xlane.xlu0 %2872
        %v2874 = vsel %vm2708, %v1615, -inf
        %2875 = vmax.xlane.f32.xlu0 %v2874
        %v2876 = vpop.xlane.xlu0 %2875
        %v2877 = vsel %vm2708, %v1751, -inf
        %2878 = vmax.xlane.f32.xlu0 %v2877
        %v2879 = vpop.xlane.xlu0 %2878
        %v2880 = vsel %vm2708, %v1887, -inf
        %2881 = vmax.xlane.f32.xlu0 %v2880
        %v2882 = vpop.xlane.xlu0 %2881
        %v2883 = vsel %vm2708, %v2023, -inf
        %2884 = vmax.xlane.f32.xlu0 %v2883
        %v2885 = vpop.xlane.xlu0 %2884
        %v2886 = vsel %vm2708, %v2159, -inf
        %2887 = vmax.xlane.f32.xlu0 %v2886
        %v2888 = vpop.xlane.xlu0 %2887
        %v2889 = vsel %vm2708, %v2295, -inf
        %2890 = vmax.xlane.f32.xlu0 %v2889
        %v2891 = vpop.xlane.xlu0 %2890
        %v2892 = vsel %vm2708, %v2431, -inf
        %2893 = vmax.xlane.f32.xlu0 %v2892
        %v2894 = vpop.xlane.xlu0 %2893
        %v2895 = vsel %vm2708, %v2567, -inf
        %2896 = vmax.xlane.f32.xlu0 %v2895
        %v2897 = vpop.xlane.xlu0 %2896
        %v2898 = vsel %vm2708, %v2703, -inf
        %2899 = vmax.xlane.f32.xlu0 %v2898
        %v2900 = vpop.xlane.xlu0 %2899
        %v2901 = vsel %vm2708, %v664, -inf
        %2902 = vmax.xlane.f32.xlu0 %v2901
        %v2903 = vpop.xlane.xlu0 %2902
        %v2904 = vsel %vm2708, %v800, -inf
        %2905 = vmax.xlane.f32.xlu0 %v2904
        %v2906 = vpop.xlane.xlu0 %2905
        %v2907 = vsel %vm2708, %v936, -inf
        %2908 = vmax.xlane.f32.xlu0 %v2907
        %v2909 = vpop.xlane.xlu0 %2908
        %v2910 = vsel %vm2708, %v1072, -inf
        %2911 = vmax.xlane.f32.xlu0 %v2910
        %v2912 = vpop.xlane.xlu0 %2911
        %v2913 = vsel %vm2708, %v1208, -inf
        %2914 = vmax.xlane.f32.xlu0 %v2913
        %v2915 = vpop.xlane.xlu0 %2914
        %v2916 = vsel %vm2708, %v1344, -inf
        %2917 = vmax.xlane.f32.xlu0 %v2916
        %v2918 = vpop.xlane.xlu0 %2917
        %v2919 = vsel %vm2708, %v1480, -inf
        %2920 = vmax.xlane.f32.xlu0 %v2919
        %v2921 = vpop.xlane.xlu0 %2920
        %v2922 = vsel %vm2708, %v1616, -inf
        %2923 = vmax.xlane.f32.xlu0 %v2922
        %v2924 = vpop.xlane.xlu0 %2923
        %v2925 = vsel %vm2708, %v1752, -inf
        %2926 = vmax.xlane.f32.xlu0 %v2925
        %v2927 = vpop.xlane.xlu0 %2926
        %v2928 = vsel %vm2708, %v1888, -inf
        %2929 = vmax.xlane.f32.xlu0 %v2928
        %v2930 = vpop.xlane.xlu0 %2929
        %v2931 = vsel %vm2708, %v2024, -inf
        %2932 = vmax.xlane.f32.xlu0 %v2931
        %v2933 = vpop.xlane.xlu0 %2932
        %v2934 = vsel %vm2708, %v2160, -inf
        %2935 = vmax.xlane.f32.xlu0 %v2934
        %v2936 = vpop.xlane.xlu0 %2935
        %v2937 = vsel %vm2708, %v2296, -inf
        %2938 = vmax.xlane.f32.xlu0 %v2937
        %v2939 = vpop.xlane.xlu0 %2938
        %v2940 = vsel %vm2708, %v2432, -inf
        %2941 = vmax.xlane.f32.xlu0 %v2940
        %v2942 = vpop.xlane.xlu0 %2941
        %v2943 = vsel %vm2708, %v2568, -inf
        %2944 = vmax.xlane.f32.xlu0 %v2943
        %v2945 = vpop.xlane.xlu0 %2944
        %v2946 = vsel %vm2708, %v2704, -inf
        %2947 = vmax.xlane.f32.xlu0 %v2946
        %v2948 = vpop.xlane.xlu0 %2947
        %v2949 = vsel %vm2708, %v665, -inf
        %2950 = vmax.xlane.f32.xlu0 %v2949
        %v2951 = vpop.xlane.xlu0 %2950
        %v2952 = vsel %vm2708, %v801, -inf
        %2953 = vmax.xlane.f32.xlu0 %v2952
        %v2954 = vpop.xlane.xlu0 %2953
        %v2955 = vsel %vm2708, %v937, -inf
        %2956 = vmax.xlane.f32.xlu0 %v2955
        %v2957 = vpop.xlane.xlu0 %2956
        %v2958 = vsel %vm2708, %v1073, -inf
        %2959 = vmax.xlane.f32.xlu0 %v2958
        %v2960 = vpop.xlane.xlu0 %2959
        %v2961 = vsel %vm2708, %v1209, -inf
        %2962 = vmax.xlane.f32.xlu0 %v2961
        %v2963 = vpop.xlane.xlu0 %2962
        %v2964 = vsel %vm2708, %v1345, -inf
        %2965 = vmax.xlane.f32.xlu0 %v2964
        %v2966 = vpop.xlane.xlu0 %2965
        %v2967 = vsel %vm2708, %v1481, -inf
        %2968 = vmax.xlane.f32.xlu0 %v2967
        %v2969 = vpop.xlane.xlu0 %2968
        %v2970 = vsel %vm2708, %v1617, -inf
        %2971 = vmax.xlane.f32.xlu0 %v2970
        %v2972 = vpop.xlane.xlu0 %2971
        %v2973 = vsel %vm2708, %v1753, -inf
        %2974 = vmax.xlane.f32.xlu0 %v2973
        %v2975 = vpop.xlane.xlu0 %2974
        %v2976 = vsel %vm2708, %v1889, -inf
        %2977 = vmax.xlane.f32.xlu0 %v2976
        %v2978 = vpop.xlane.xlu0 %2977
        %v2979 = vsel %vm2708, %v2025, -inf
        %2980 = vmax.xlane.f32.xlu0 %v2979
        %v2981 = vpop.xlane.xlu0 %2980
        %v2982 = vsel %vm2708, %v2161, -inf
        %2983 = vmax.xlane.f32.xlu0 %v2982
        %v2984 = vpop.xlane.xlu0 %2983
        %v2985 = vsel %vm2708, %v2297, -inf
        %2986 = vmax.xlane.f32.xlu0 %v2985
        %v2987 = vpop.xlane.xlu0 %2986
        %v2988 = vsel %vm2708, %v2433, -inf
        %2989 = vmax.xlane.f32.xlu0 %v2988
        %v2990 = vpop.xlane.xlu0 %2989
        %v2991 = vsel %vm2708, %v2569, -inf
        %2992 = vmax.xlane.f32.xlu0 %v2991
        %v2993 = vpop.xlane.xlu0 %2992
        %v2994 = vsel %vm2708, %v2705, -inf
        %2995 = vmax.xlane.f32.xlu0 %v2994
        %v2996 = vpop.xlane.xlu0 %2995
        %v2997 = vsel %vm2708, %v666, -inf
        %2998 = vmax.xlane.f32.xlu0 %v2997
        %v2999 = vpop.xlane.xlu0 %2998
        %v3000 = vsel %vm2708, %v802, -inf
        %3001 = vmax.xlane.f32.xlu0 %v3000
        %v3002 = vpop.xlane.xlu0 %3001
        %v3003 = vsel %vm2708, %v938, -inf
        %3004 = vmax.xlane.f32.xlu0 %v3003
        %v3005 = vpop.xlane.xlu0 %3004
        %v3006 = vsel %vm2708, %v1074, -inf
        %3007 = vmax.xlane.f32.xlu0 %v3006
        %v3008 = vpop.xlane.xlu0 %3007
        %v3009 = vsel %vm2708, %v1210, -inf
        %3010 = vmax.xlane.f32.xlu0 %v3009
        %v3011 = vpop.xlane.xlu0 %3010
        %v3012 = vsel %vm2708, %v1346, -inf
        %3013 = vmax.xlane.f32.xlu0 %v3012
        %v3014 = vpop.xlane.xlu0 %3013
        %v3015 = vsel %vm2708, %v1482, -inf
        %3016 = vmax.xlane.f32.xlu0 %v3015
        %v3017 = vpop.xlane.xlu0 %3016
        %v3018 = vsel %vm2708, %v1618, -inf
        %3019 = vmax.xlane.f32.xlu0 %v3018
        %v3020 = vpop.xlane.xlu0 %3019
        %v3021 = vsel %vm2708, %v1754, -inf
        %3022 = vmax.xlane.f32.xlu0 %v3021
        %v3023 = vpop.xlane.xlu0 %3022
        %v3024 = vsel %vm2708, %v1890, -inf
        %3025 = vmax.xlane.f32.xlu0 %v3024
        %v3026 = vpop.xlane.xlu0 %3025
        %v3027 = vsel %vm2708, %v2026, -inf
        %3028 = vmax.xlane.f32.xlu0 %v3027
        %v3029 = vpop.xlane.xlu0 %3028
        %v3030 = vsel %vm2708, %v2162, -inf
        %3031 = vmax.xlane.f32.xlu0 %v3030
        %v3032 = vpop.xlane.xlu0 %3031
        %v3033 = vsel %vm2708, %v2298, -inf
        %3034 = vmax.xlane.f32.xlu0 %v3033
        %v3035 = vpop.xlane.xlu0 %3034
        %v3036 = vsel %vm2708, %v2434, -inf
        %3037 = vmax.xlane.f32.xlu0 %v3036
        %v3038 = vpop.xlane.xlu0 %3037
        %v3039 = vsel %vm2708, %v2570, -inf
        %3040 = vmax.xlane.f32.xlu0 %v3039
        %v3041 = vpop.xlane.xlu0 %3040
        %v3042 = vsel %vm2708, %v2706, -inf
        %3043 = vmax.xlane.f32.xlu0 %v3042
        %v3044 = vpop.xlane.xlu0 %3043
        %v3045 = vsel %vm2708, %v667, -inf
        %3046 = vmax.xlane.f32.xlu0 %v3045
        %v3047 = vpop.xlane.xlu0 %3046
        %v3048 = vsel %vm2708, %v803, -inf
        %3049 = vmax.xlane.f32.xlu0 %v3048
        %v3050 = vpop.xlane.xlu0 %3049
        %v3051 = vsel %vm2708, %v939, -inf
        %3052 = vmax.xlane.f32.xlu0 %v3051
        %v3053 = vpop.xlane.xlu0 %3052
        %v3054 = vsel %vm2708, %v1075, -inf
        %3055 = vmax.xlane.f32.xlu0 %v3054
        %v3056 = vpop.xlane.xlu0 %3055
        %v3057 = vsel %vm2708, %v1211, -inf
        %3058 = vmax.xlane.f32.xlu0 %v3057
        %v3059 = vpop.xlane.xlu0 %3058
        %v3060 = vsel %vm2708, %v1347, -inf
        %3061 = vmax.xlane.f32.xlu0 %v3060
        %v3062 = vpop.xlane.xlu0 %3061
        %v3063 = vsel %vm2708, %v1483, -inf
        %3064 = vmax.xlane.f32.xlu0 %v3063
        %v3065 = vpop.xlane.xlu0 %3064
        %v3066 = vsel %vm2708, %v1619, -inf
        %3067 = vmax.xlane.f32.xlu0 %v3066
        %v3068 = vpop.xlane.xlu0 %3067
        %v3069 = vsel %vm2708, %v1755, -inf
        %3070 = vmax.xlane.f32.xlu0 %v3069
        %v3071 = vpop.xlane.xlu0 %3070
        %v3072 = vsel %vm2708, %v1891, -inf
        %3073 = vmax.xlane.f32.xlu0 %v3072
        %v3074 = vpop.xlane.xlu0 %3073
        %v3075 = vsel %vm2708, %v2027, -inf
        %3076 = vmax.xlane.f32.xlu0 %v3075
        %v3077 = vpop.xlane.xlu0 %3076
        %v3078 = vsel %vm2708, %v2163, -inf
        %3079 = vmax.xlane.f32.xlu0 %v3078
        %v3080 = vpop.xlane.xlu0 %3079
        %v3081 = vsel %vm2708, %v2299, -inf
        %3082 = vmax.xlane.f32.xlu0 %v3081
        %v3083 = vpop.xlane.xlu0 %3082
        %v3084 = vsel %vm2708, %v2435, -inf
        %3085 = vmax.xlane.f32.xlu0 %v3084
        %v3086 = vpop.xlane.xlu0 %3085
        %v3087 = vsel %vm2708, %v2571, -inf
        %3088 = vmax.xlane.f32.xlu0 %v3087
        %v3089 = vpop.xlane.xlu0 %3088
        %v3090 = vsel %vm2708, %v2707, -inf
        %3091 = vmax.xlane.f32.xlu0 %v3090
        %v3092 = vpop.xlane.xlu0 %3091
        %v3221 = vlaneseq
        %v3222 = vand.u32 %v3221, 127
        %v3223 = vlaneseq
        %v3224 = vshrl.u32 %v3223, 7
        %v3225 = vsub.s32 %v3222, %v3224
        %v3226 = vrot.slane %v2711, %v3225
        %v3227 = vadd.s32 %v3222, 4294967288
        %v3228 = vlaneseq
        %v3229 = vshrl.u32 %v3228, 7
        %v3230 = vsub.s32 %v3227, %v3229
        %v3231 = vrot.slane %v2714, %v3230
        %vm3232 = vcmask 130112
        %v3233 = vsel %vm3232, %v3231, %v3226
        %v3234 = vadd.s32 %v3222, 4294967280
        %v3235 = vlaneseq
        %v3236 = vshrl.u32 %v3235, 7
        %v3237 = vsub.s32 %v3234, %v3236
        %v3238 = vrot.slane %v2717, %v3237
        %vm3239 = vcmask 195712
        %v3240 = vsel %vm3239, %v3238, %v3233
        %v3241 = vadd.s32 %v3222, 4294967272
        %v3242 = vlaneseq
        %v3243 = vshrl.u32 %v3242, 7
        %v3244 = vsub.s32 %v3241, %v3243
        %v3245 = vrot.slane %v2720, %v3244
        %vm3246 = vcmask 261312
        %v3247 = vsel %vm3246, %v3245, %v3240
        %v3248 = vadd.s32 %v3222, 4294967264
        %v3249 = vlaneseq
        %v3250 = vshrl.u32 %v3249, 7
        %v3251 = vsub.s32 %v3248, %v3250
        %v3252 = vrot.slane %v2723, %v3251
        %vm3253 = vcmask 326912
        %v3254 = vsel %vm3253, %v3252, %v3247
        %v3255 = vadd.s32 %v3222, 4294967256
        %v3256 = vlaneseq
        %v3257 = vshrl.u32 %v3256, 7
        %v3258 = vsub.s32 %v3255, %v3257
        %v3259 = vrot.slane %v2726, %v3258
        %vm3260 = vcmask 392512
        %v3261 = vsel %vm3260, %v3259, %v3254
        %v3262 = vadd.s32 %v3222, 4294967248
        %v3263 = vlaneseq
        %v3264 = vshrl.u32 %v3263, 7
        %v3265 = vsub.s32 %v3262, %v3264
        %v3266 = vrot.slane %v2729, %v3265
        %vm3267 = vcmask 458112
        %v3268 = vsel %vm3267, %v3266, %v3261
        %v3269 = vadd.s32 %v3222, 4294967240
        %v3270 = vlaneseq
        %v3271 = vshrl.u32 %v3270, 7
        %v3272 = vsub.s32 %v3269, %v3271
        %v3273 = vrot.slane %v2732, %v3272
        %vm3274 = vcmask 523712
        %v3275 = vsel %vm3274, %v3273, %v3268
        %v3276 = vadd.s32 %v3222, 4294967232
        %v3277 = vlaneseq
        %v3278 = vshrl.u32 %v3277, 7
        %v3279 = vsub.s32 %v3276, %v3278
        %v3280 = vrot.slane %v2735, %v3279
        %vm3281 = vcmask 589312
        %v3282 = vsel %vm3281, %v3280, %v3275
        %v3283 = vadd.s32 %v3222, 4294967224
        %v3284 = vlaneseq
        %v3285 = vshrl.u32 %v3284, 7
        %v3286 = vsub.s32 %v3283, %v3285
        %v3287 = vrot.slane %v2738, %v3286
        %vm3288 = vcmask 654912
        %v3289 = vsel %vm3288, %v3287, %v3282
        %v3290 = vadd.s32 %v3222, 4294967216
        %v3291 = vlaneseq
        %v3292 = vshrl.u32 %v3291, 7
        %v3293 = vsub.s32 %v3290, %v3292
        %v3294 = vrot.slane %v2741, %v3293
        %vm3295 = vcmask 720512
        %v3296 = vsel %vm3295, %v3294, %v3289
        %v3297 = vadd.s32 %v3222, 4294967208
        %v3298 = vlaneseq
        %v3299 = vshrl.u32 %v3298, 7
        %v3300 = vsub.s32 %v3297, %v3299
        %v3301 = vrot.slane %v2744, %v3300
        %vm3302 = vcmask 786112
        %v3303 = vsel %vm3302, %v3301, %v3296
        %v3304 = vadd.s32 %v3222, 4294967200
        %v3305 = vlaneseq
        %v3306 = vshrl.u32 %v3305, 7
        %v3307 = vsub.s32 %v3304, %v3306
        %v3308 = vrot.slane %v2747, %v3307
        %vm3309 = vcmask 851712
        %v3310 = vsel %vm3309, %v3308, %v3303
        %v3311 = vadd.s32 %v3222, 4294967192
        %v3312 = vlaneseq
        %v3313 = vshrl.u32 %v3312, 7
        %v3314 = vsub.s32 %v3311, %v3313
        %v3315 = vrot.slane %v2750, %v3314
        %vm3316 = vcmask 917312
        %v3317 = vsel %vm3316, %v3315, %v3310
        %v3318 = vadd.s32 %v3222, 4294967184
        %v3319 = vlaneseq
        %v3320 = vshrl.u32 %v3319, 7
        %v3321 = vsub.s32 %v3318, %v3320
        %v3322 = vrot.slane %v2753, %v3321
        %vm3323 = vcmask 982912
        %v3324 = vsel %vm3323, %v3322, %v3317
        %v3325 = vadd.s32 %v3222, 4294967176
        %v3326 = vlaneseq
        %v3327 = vshrl.u32 %v3326, 7
        %v3328 = vsub.s32 %v3325, %v3327
        %v3329 = vrot.slane %v2756, %v3328
        %vm3330 = vcmask 1048512
        %v3331 = vsel %vm3330, %v3329, %v3324
        %v3332 = vlaneseq
        %v3333 = vshrl.u32 %v3332, 7
        %v3334 = vsub.s32 %v3222, %v3333
        %v3335 = vrot.slane %v2759, %v3334
        %v3336 = vlaneseq
        %v3337 = vshrl.u32 %v3336, 7
        %v3338 = vsub.s32 %v3227, %v3337
        %v3339 = vrot.slane %v2762, %v3338
        %v3340 = vsel %vm3232, %v3339, %v3335
        %v3341 = vlaneseq
        %v3342 = vshrl.u32 %v3341, 7
        %v3343 = vsub.s32 %v3234, %v3342
        %v3344 = vrot.slane %v2765, %v3343
        %v3345 = vsel %vm3239, %v3344, %v3340
        %v3346 = vlaneseq
        %v3347 = vshrl.u32 %v3346, 7
        %v3348 = vsub.s32 %v3241, %v3347
        %v3349 = vrot.slane %v2768, %v3348
        %v3350 = vsel %vm3246, %v3349, %v3345
        %v3351 = vlaneseq
        %v3352 = vshrl.u32 %v3351, 7
        %v3353 = vsub.s32 %v3248, %v3352
        %v3354 = vrot.slane %v2771, %v3353
        %v3355 = vsel %vm3253, %v3354, %v3350
        %v3356 = vlaneseq
        %v3357 = vshrl.u32 %v3356, 7
        %v3358 = vsub.s32 %v3255, %v3357
        %v3359 = vrot.slane %v2774, %v3358
        %v3360 = vsel %vm3260, %v3359, %v3355
        %v3361 = vlaneseq
        %v3362 = vshrl.u32 %v3361, 7
        %v3363 = vsub.s32 %v3262, %v3362
        %v3364 = vrot.slane %v2777, %v3363
        %v3365 = vsel %vm3267, %v3364, %v3360
        %v3366 = vlaneseq
        %v3367 = vshrl.u32 %v3366, 7
        %v3368 = vsub.s32 %v3269, %v3367
        %v3369 = vrot.slane %v2780, %v3368
        %v3370 = vsel %vm3274, %v3369, %v3365
        %v3371 = vlaneseq
        %v3372 = vshrl.u32 %v3371, 7
        %v3373 = vsub.s32 %v3276, %v3372
        %v3374 = vrot.slane %v2783, %v3373
        %v3375 = vsel %vm3281, %v3374, %v3370
        %v3376 = vlaneseq
        %v3377 = vshrl.u32 %v3376, 7
        %v3378 = vsub.s32 %v3283, %v3377
        %v3379 = vrot.slane %v2786, %v3378
        %v3380 = vsel %vm3288, %v3379, %v3375
        %v3381 = vlaneseq
        %v3382 = vshrl.u32 %v3381, 7
        %v3383 = vsub.s32 %v3290, %v3382
        %v3384 = vrot.slane %v2789, %v3383
        %v3385 = vsel %vm3295, %v3384, %v3380
        %v3386 = vlaneseq
        %v3387 = vshrl.u32 %v3386, 7
        %v3388 = vsub.s32 %v3297, %v3387
        %v3389 = vrot.slane %v2792, %v3388
        %v3390 = vsel %vm3302, %v3389, %v3385
        %v3391 = vlaneseq
        %v3392 = vshrl.u32 %v3391, 7
        %v3393 = vsub.s32 %v3304, %v3392
        %v3394 = vrot.slane %v2795, %v3393
        %v3395 = vsel %vm3309, %v3394, %v3390
        %v3396 = vlaneseq
        %v3397 = vshrl.u32 %v3396, 7
        %v3398 = vsub.s32 %v3311, %v3397
        %v3399 = vrot.slane %v2798, %v3398
        %v3400 = vsel %vm3316, %v3399, %v3395
        %v3401 = vlaneseq
        %v3402 = vshrl.u32 %v3401, 7
        %v3403 = vsub.s32 %v3318, %v3402
        %v3404 = vrot.slane %v2801, %v3403
        %v3405 = vsel %vm3323, %v3404, %v3400
        %v3406 = vlaneseq
        %v3407 = vshrl.u32 %v3406, 7
        %v3408 = vsub.s32 %v3325, %v3407
        %v3409 = vrot.slane %v2804, %v3408
        %v3410 = vsel %vm3330, %v3409, %v3405
        %v3411 = vlaneseq
        %v3412 = vshrl.u32 %v3411, 7
        %v3413 = vsub.s32 %v3222, %v3412
        %v3414 = vrot.slane %v2807, %v3413
        %v3415 = vlaneseq
        %v3416 = vshrl.u32 %v3415, 7
        %v3417 = vsub.s32 %v3227, %v3416
        %v3418 = vrot.slane %v2810, %v3417
        %v3419 = vsel %vm3232, %v3418, %v3414
        %v3420 = vlaneseq
        %v3421 = vshrl.u32 %v3420, 7
        %v3422 = vsub.s32 %v3234, %v3421
        %v3423 = vrot.slane %v2813, %v3422
        %v3424 = vsel %vm3239, %v3423, %v3419
        %v3425 = vlaneseq
        %v3426 = vshrl.u32 %v3425, 7
        %v3427 = vsub.s32 %v3241, %v3426
        %v3428 = vrot.slane %v2816, %v3427
        %v3429 = vsel %vm3246, %v3428, %v3424
        %v3430 = vlaneseq
        %v3431 = vshrl.u32 %v3430, 7
        %v3432 = vsub.s32 %v3248, %v3431
        %v3433 = vrot.slane %v2819, %v3432
        %v3434 = vsel %vm3253, %v3433, %v3429
        %v3435 = vlaneseq
        %v3436 = vshrl.u32 %v3435, 7
        %v3437 = vsub.s32 %v3255, %v3436
        %v3438 = vrot.slane %v2822, %v3437
        %v3439 = vsel %vm3260, %v3438, %v3434
        %v3440 = vlaneseq
        %v3441 = vshrl.u32 %v3440, 7
        %v3442 = vsub.s32 %v3262, %v3441
        %v3443 = vrot.slane %v2825, %v3442
        %v3444 = vsel %vm3267, %v3443, %v3439
        %v3445 = vlaneseq
        %v3446 = vshrl.u32 %v3445, 7
        %v3447 = vsub.s32 %v3269, %v3446
        %v3448 = vrot.slane %v2828, %v3447
        %v3449 = vsel %vm3274, %v3448, %v3444
        %v3450 = vlaneseq
        %v3451 = vshrl.u32 %v3450, 7
        %v3452 = vsub.s32 %v3276, %v3451
        %v3453 = vrot.slane %v2831, %v3452
        %v3454 = vsel %vm3281, %v3453, %v3449
        %v3455 = vlaneseq
        %v3456 = vshrl.u32 %v3455, 7
        %v3457 = vsub.s32 %v3283, %v3456
        %v3458 = vrot.slane %v2834, %v3457
        %v3459 = vsel %vm3288, %v3458, %v3454
        %v3460 = vlaneseq
        %v3461 = vshrl.u32 %v3460, 7
        %v3462 = vsub.s32 %v3290, %v3461
        %v3463 = vrot.slane %v2837, %v3462
        %v3464 = vsel %vm3295, %v3463, %v3459
        %v3465 = vlaneseq
        %v3466 = vshrl.u32 %v3465, 7
        %v3467 = vsub.s32 %v3297, %v3466
        %v3468 = vrot.slane %v2840, %v3467
        %v3469 = vsel %vm3302, %v3468, %v3464
        %v3470 = vlaneseq
        %v3471 = vshrl.u32 %v3470, 7
        %v3472 = vsub.s32 %v3304, %v3471
        %v3473 = vrot.slane %v2843, %v3472
        %v3474 = vsel %vm3309, %v3473, %v3469
        %v3475 = vlaneseq
        %v3476 = vshrl.u32 %v3475, 7
        %v3477 = vsub.s32 %v3311, %v3476
        %v3478 = vrot.slane %v2846, %v3477
        %v3479 = vsel %vm3316, %v3478, %v3474
        %v3480 = vlaneseq
        %v3481 = vshrl.u32 %v3480, 7
        %v3482 = vsub.s32 %v3318, %v3481
        %v3483 = vrot.slane %v2849, %v3482
        %v3484 = vsel %vm3323, %v3483, %v3479
        %v3485 = vlaneseq
        %v3486 = vshrl.u32 %v3485, 7
        %v3487 = vsub.s32 %v3325, %v3486
        %v3488 = vrot.slane %v2852, %v3487
        %v3489 = vsel %vm3330, %v3488, %v3484
        %v3490 = vlaneseq
        %v3491 = vshrl.u32 %v3490, 7
        %v3492 = vsub.s32 %v3222, %v3491
        %v3493 = vrot.slane %v2855, %v3492
        %v3494 = vlaneseq
        %v3495 = vshrl.u32 %v3494, 7
        %v3496 = vsub.s32 %v3227, %v3495
        %v3497 = vrot.slane %v2858, %v3496
        %v3498 = vsel %vm3232, %v3497, %v3493
        %v3499 = vlaneseq
        %v3500 = vshrl.u32 %v3499, 7
        %v3501 = vsub.s32 %v3234, %v3500
        %v3502 = vrot.slane %v2861, %v3501
        %v3503 = vsel %vm3239, %v3502, %v3498
        %v3504 = vlaneseq
        %v3505 = vshrl.u32 %v3504, 7
        %v3506 = vsub.s32 %v3241, %v3505
        %v3507 = vrot.slane %v2864, %v3506
        %v3508 = vsel %vm3246, %v3507, %v3503
        %v3509 = vlaneseq
        %v3510 = vshrl.u32 %v3509, 7
        %v3511 = vsub.s32 %v3248, %v3510
        %v3512 = vrot.slane %v2867, %v3511
        %v3513 = vsel %vm3253, %v3512, %v3508
        %v3514 = vlaneseq
        %v3515 = vshrl.u32 %v3514, 7
        %v3516 = vsub.s32 %v3255, %v3515
        %v3517 = vrot.slane %v2870, %v3516
        %v3518 = vsel %vm3260, %v3517, %v3513
        %v3519 = vlaneseq
        %v3520 = vshrl.u32 %v3519, 7
        %v3521 = vsub.s32 %v3262, %v3520
        %v3522 = vrot.slane %v2873, %v3521
        %v3523 = vsel %vm3267, %v3522, %v3518
        %v3524 = vlaneseq
        %v3525 = vshrl.u32 %v3524, 7
        %v3526 = vsub.s32 %v3269, %v3525
        %v3527 = vrot.slane %v2876, %v3526
        %v3528 = vsel %vm3274, %v3527, %v3523
        %v3529 = vlaneseq
        %v3530 = vshrl.u32 %v3529, 7
        %v3531 = vsub.s32 %v3276, %v3530
        %v3532 = vrot.slane %v2879, %v3531
        %v3533 = vsel %vm3281, %v3532, %v3528
        %v3534 = vlaneseq
        %v3535 = vshrl.u32 %v3534, 7
        %v3536 = vsub.s32 %v3283, %v3535
        %v3537 = vrot.slane %v2882, %v3536
        %v3538 = vsel %vm3288, %v3537, %v3533
        %v3539 = vlaneseq
        %v3540 = vshrl.u32 %v3539, 7
        %v3541 = vsub.s32 %v3290, %v3540
        %v3542 = vrot.slane %v2885, %v3541
        %v3543 = vsel %vm3295, %v3542, %v3538
        %v3544 = vlaneseq
        %v3545 = vshrl.u32 %v3544, 7
        %v3546 = vsub.s32 %v3297, %v3545
        %v3547 = vrot.slane %v2888, %v3546
        %v3548 = vsel %vm3302, %v3547, %v3543
        %v3549 = vlaneseq
        %v3550 = vshrl.u32 %v3549, 7
        %v3551 = vsub.s32 %v3304, %v3550
        %v3552 = vrot.slane %v2891, %v3551
        %v3553 = vsel %vm3309, %v3552, %v3548
        %v3554 = vlaneseq
        %v3555 = vshrl.u32 %v3554, 7
        %v3556 = vsub.s32 %v3311, %v3555
        %v3557 = vrot.slane %v2894, %v3556
        %v3558 = vsel %vm3316, %v3557, %v3553
        %v3559 = vlaneseq
        %v3560 = vshrl.u32 %v3559, 7
        %v3561 = vsub.s32 %v3318, %v3560
        %v3562 = vrot.slane %v2897, %v3561
        %v3563 = vsel %vm3323, %v3562, %v3558
        %v3564 = vlaneseq
        %v3565 = vshrl.u32 %v3564, 7
        %v3566 = vsub.s32 %v3325, %v3565
        %v3567 = vrot.slane %v2900, %v3566
        %v3568 = vsel %vm3330, %v3567, %v3563
        %v3569 = vlaneseq
        %v3570 = vshrl.u32 %v3569, 7
        %v3571 = vsub.s32 %v3222, %v3570
        %v3572 = vrot.slane %v2903, %v3571
        %v3573 = vlaneseq
        %v3574 = vshrl.u32 %v3573, 7
        %v3575 = vsub.s32 %v3227, %v3574
        %v3576 = vrot.slane %v2906, %v3575
        %v3577 = vsel %vm3232, %v3576, %v3572
        %v3578 = vlaneseq
        %v3579 = vshrl.u32 %v3578, 7
        %v3580 = vsub.s32 %v3234, %v3579
        %v3581 = vrot.slane %v2909, %v3580
        %v3582 = vsel %vm3239, %v3581, %v3577
        %v3583 = vlaneseq
        %v3584 = vshrl.u32 %v3583, 7
        %v3585 = vsub.s32 %v3241, %v3584
        %v3586 = vrot.slane %v2912, %v3585
        %v3587 = vsel %vm3246, %v3586, %v3582
        %v3588 = vlaneseq
        %v3589 = vshrl.u32 %v3588, 7
        %v3590 = vsub.s32 %v3248, %v3589
        %v3591 = vrot.slane %v2915, %v3590
        %v3592 = vsel %vm3253, %v3591, %v3587
        %v3593 = vlaneseq
        %v3594 = vshrl.u32 %v3593, 7
        %v3595 = vsub.s32 %v3255, %v3594
        %v3596 = vrot.slane %v2918, %v3595
        %v3597 = vsel %vm3260, %v3596, %v3592
        %v3598 = vlaneseq
        %v3599 = vshrl.u32 %v3598, 7
        %v3600 = vsub.s32 %v3262, %v3599
        %v3601 = vrot.slane %v2921, %v3600
        %v3602 = vsel %vm3267, %v3601, %v3597
        %v3603 = vlaneseq
        %v3604 = vshrl.u32 %v3603, 7
        %v3605 = vsub.s32 %v3269, %v3604
        %v3606 = vrot.slane %v2924, %v3605
        %v3607 = vsel %vm3274, %v3606, %v3602
        %v3608 = vlaneseq
        %v3609 = vshrl.u32 %v3608, 7
        %v3610 = vsub.s32 %v3276, %v3609
        %v3611 = vrot.slane %v2927, %v3610
        %v3612 = vsel %vm3281, %v3611, %v3607
        %v3613 = vlaneseq
        %v3614 = vshrl.u32 %v3613, 7
        %v3615 = vsub.s32 %v3283, %v3614
        %v3616 = vrot.slane %v2930, %v3615
        %v3617 = vsel %vm3288, %v3616, %v3612
        %v3618 = vlaneseq
        %v3619 = vshrl.u32 %v3618, 7
        %v3620 = vsub.s32 %v3290, %v3619
        %v3621 = vrot.slane %v2933, %v3620
        %v3622 = vsel %vm3295, %v3621, %v3617
        %v3623 = vlaneseq
        %v3624 = vshrl.u32 %v3623, 7
        %v3625 = vsub.s32 %v3297, %v3624
        %v3626 = vrot.slane %v2936, %v3625
        %v3627 = vsel %vm3302, %v3626, %v3622
        %v3628 = vlaneseq
        %v3629 = vshrl.u32 %v3628, 7
        %v3630 = vsub.s32 %v3304, %v3629
        %v3631 = vrot.slane %v2939, %v3630
        %v3632 = vsel %vm3309, %v3631, %v3627
        %v3633 = vlaneseq
        %v3634 = vshrl.u32 %v3633, 7
        %v3635 = vsub.s32 %v3311, %v3634
        %v3636 = vrot.slane %v2942, %v3635
        %v3637 = vsel %vm3316, %v3636, %v3632
        %v3638 = vlaneseq
        %v3639 = vshrl.u32 %v3638, 7
        %v3640 = vsub.s32 %v3318, %v3639
        %v3641 = vrot.slane %v2945, %v3640
        %v3642 = vsel %vm3323, %v3641, %v3637
        %v3643 = vlaneseq
        %v3644 = vshrl.u32 %v3643, 7
        %v3645 = vsub.s32 %v3325, %v3644
        %v3646 = vrot.slane %v2948, %v3645
        %v3647 = vsel %vm3330, %v3646, %v3642
        %v3648 = vlaneseq
        %v3649 = vshrl.u32 %v3648, 7
        %v3650 = vsub.s32 %v3222, %v3649
        %v3651 = vrot.slane %v2951, %v3650
        %v3652 = vlaneseq
        %v3653 = vshrl.u32 %v3652, 7
        %v3654 = vsub.s32 %v3227, %v3653
        %v3655 = vrot.slane %v2954, %v3654
        %v3656 = vsel %vm3232, %v3655, %v3651
        %v3657 = vlaneseq
        %v3658 = vshrl.u32 %v3657, 7
        %v3659 = vsub.s32 %v3234, %v3658
        %v3660 = vrot.slane %v2957, %v3659
        %v3661 = vsel %vm3239, %v3660, %v3656
        %v3662 = vlaneseq
        %v3663 = vshrl.u32 %v3662, 7
        %v3664 = vsub.s32 %v3241, %v3663
        %v3665 = vrot.slane %v2960, %v3664
        %v3666 = vsel %vm3246, %v3665, %v3661
        %v3667 = vlaneseq
        %v3668 = vshrl.u32 %v3667, 7
        %v3669 = vsub.s32 %v3248, %v3668
        %v3670 = vrot.slane %v2963, %v3669
        %v3671 = vsel %vm3253, %v3670, %v3666
        %v3672 = vlaneseq
        %v3673 = vshrl.u32 %v3672, 7
        %v3674 = vsub.s32 %v3255, %v3673
        %v3675 = vrot.slane %v2966, %v3674
        %v3676 = vsel %vm3260, %v3675, %v3671
        %v3677 = vlaneseq
        %v3678 = vshrl.u32 %v3677, 7
        %v3679 = vsub.s32 %v3262, %v3678
        %v3680 = vrot.slane %v2969, %v3679
        %v3681 = vsel %vm3267, %v3680, %v3676
        %v3682 = vlaneseq
        %v3683 = vshrl.u32 %v3682, 7
        %v3684 = vsub.s32 %v3269, %v3683
        %v3685 = vrot.slane %v2972, %v3684
        %v3686 = vsel %vm3274, %v3685, %v3681
        %v3687 = vlaneseq
        %v3688 = vshrl.u32 %v3687, 7
        %v3689 = vsub.s32 %v3276, %v3688
        %v3690 = vrot.slane %v2975, %v3689
        %v3691 = vsel %vm3281, %v3690, %v3686
        %v3692 = vlaneseq
        %v3693 = vshrl.u32 %v3692, 7
        %v3694 = vsub.s32 %v3283, %v3693
        %v3695 = vrot.slane %v2978, %v3694
        %v3696 = vsel %vm3288, %v3695, %v3691
        %v3697 = vlaneseq
        %v3698 = vshrl.u32 %v3697, 7
        %v3699 = vsub.s32 %v3290, %v3698
        %v3700 = vrot.slane %v2981, %v3699
        %v3701 = vsel %vm3295, %v3700, %v3696
        %v3702 = vlaneseq
        %v3703 = vshrl.u32 %v3702, 7
        %v3704 = vsub.s32 %v3297, %v3703
        %v3705 = vrot.slane %v2984, %v3704
        %v3706 = vsel %vm3302, %v3705, %v3701
        %v3707 = vlaneseq
        %v3708 = vshrl.u32 %v3707, 7
        %v3709 = vsub.s32 %v3304, %v3708
        %v3710 = vrot.slane %v2987, %v3709
        %v3711 = vsel %vm3309, %v3710, %v3706
        %v3712 = vlaneseq
        %v3713 = vshrl.u32 %v3712, 7
        %v3714 = vsub.s32 %v3311, %v3713
        %v3715 = vrot.slane %v2990, %v3714
        %v3716 = vsel %vm3316, %v3715, %v3711
        %v3717 = vlaneseq
        %v3718 = vshrl.u32 %v3717, 7
        %v3719 = vsub.s32 %v3318, %v3718
        %v3720 = vrot.slane %v2993, %v3719
        %v3721 = vsel %vm3323, %v3720, %v3716
        %v3722 = vlaneseq
        %v3723 = vshrl.u32 %v3722, 7
        %v3724 = vsub.s32 %v3325, %v3723
        %v3725 = vrot.slane %v2996, %v3724
        %v3726 = vsel %vm3330, %v3725, %v3721
        %v3727 = vlaneseq
        %v3728 = vshrl.u32 %v3727, 7
        %v3729 = vsub.s32 %v3222, %v3728
        %v3730 = vrot.slane %v2999, %v3729
        %v3731 = vlaneseq
        %v3732 = vshrl.u32 %v3731, 7
        %v3733 = vsub.s32 %v3227, %v3732
        %v3734 = vrot.slane %v3002, %v3733
        %v3735 = vsel %vm3232, %v3734, %v3730
        %v3736 = vlaneseq
        %v3737 = vshrl.u32 %v3736, 7
        %v3738 = vsub.s32 %v3234, %v3737
        %v3739 = vrot.slane %v3005, %v3738
        %v3740 = vsel %vm3239, %v3739, %v3735
        %v3741 = vlaneseq
        %v3742 = vshrl.u32 %v3741, 7
        %v3743 = vsub.s32 %v3241, %v3742
        %v3744 = vrot.slane %v3008, %v3743
        %v3745 = vsel %vm3246, %v3744, %v3740
        %v3746 = vlaneseq
        %v3747 = vshrl.u32 %v3746, 7
        %v3748 = vsub.s32 %v3248, %v3747
        %v3749 = vrot.slane %v3011, %v3748
        %v3750 = vsel %vm3253, %v3749, %v3745
        %v3751 = vlaneseq
        %v3752 = vshrl.u32 %v3751, 7
        %v3753 = vsub.s32 %v3255, %v3752
        %v3754 = vrot.slane %v3014, %v3753
        %v3755 = vsel %vm3260, %v3754, %v3750
        %v3756 = vlaneseq
        %v3757 = vshrl.u32 %v3756, 7
        %v3758 = vsub.s32 %v3262, %v3757
        %v3759 = vrot.slane %v3017, %v3758
        %v3760 = vsel %vm3267, %v3759, %v3755
        %v3761 = vlaneseq
        %v3762 = vshrl.u32 %v3761, 7
        %v3763 = vsub.s32 %v3269, %v3762
        %v3764 = vrot.slane %v3020, %v3763
        %v3765 = vsel %vm3274, %v3764, %v3760
        %v3766 = vlaneseq
        %v3767 = vshrl.u32 %v3766, 7
        %v3768 = vsub.s32 %v3276, %v3767
        %v3769 = vrot.slane %v3023, %v3768
        %v3770 = vsel %vm3281, %v3769, %v3765
        %v3771 = vlaneseq
        %v3772 = vshrl.u32 %v3771, 7
        %v3773 = vsub.s32 %v3283, %v3772
        %v3774 = vrot.slane %v3026, %v3773
        %v3775 = vsel %vm3288, %v3774, %v3770
        %v3776 = vlaneseq
        %v3777 = vshrl.u32 %v3776, 7
        %v3778 = vsub.s32 %v3290, %v3777
        %v3779 = vrot.slane %v3029, %v3778
        %v3780 = vsel %vm3295, %v3779, %v3775
        %v3781 = vlaneseq
        %v3782 = vshrl.u32 %v3781, 7
        %v3783 = vsub.s32 %v3297, %v3782
        %v3784 = vrot.slane %v3032, %v3783
        %v3785 = vsel %vm3302, %v3784, %v3780
        %v3786 = vlaneseq
        %v3787 = vshrl.u32 %v3786, 7
        %v3788 = vsub.s32 %v3304, %v3787
        %v3789 = vrot.slane %v3035, %v3788
        %v3790 = vsel %vm3309, %v3789, %v3785
        %v3791 = vlaneseq
        %v3792 = vshrl.u32 %v3791, 7
        %v3793 = vsub.s32 %v3311, %v3792
        %v3794 = vrot.slane %v3038, %v3793
        %v3795 = vsel %vm3316, %v3794, %v3790
        %v3796 = vlaneseq
        %v3797 = vshrl.u32 %v3796, 7
        %v3798 = vsub.s32 %v3318, %v3797
        %v3799 = vrot.slane %v3041, %v3798
        %v3800 = vsel %vm3323, %v3799, %v3795
        %v3801 = vlaneseq
        %v3802 = vshrl.u32 %v3801, 7
        %v3803 = vsub.s32 %v3325, %v3802
        %v3804 = vrot.slane %v3044, %v3803
        %v3805 = vsel %vm3330, %v3804, %v3800
        %v3806 = vlaneseq
        %v3807 = vshrl.u32 %v3806, 7
        %v3808 = vsub.s32 %v3222, %v3807
        %v3809 = vrot.slane %v3047, %v3808
        %v3810 = vlaneseq
        %v3811 = vshrl.u32 %v3810, 7
        %v3812 = vsub.s32 %v3227, %v3811
        %v3813 = vrot.slane %v3050, %v3812
        %v3814 = vsel %vm3232, %v3813, %v3809
        %v3815 = vlaneseq
        %v3816 = vshrl.u32 %v3815, 7
        %v3817 = vsub.s32 %v3234, %v3816
        %v3818 = vrot.slane %v3053, %v3817
        %v3819 = vsel %vm3239, %v3818, %v3814
        %v3820 = vlaneseq
        %v3821 = vshrl.u32 %v3820, 7
        %v3822 = vsub.s32 %v3241, %v3821
        %v3823 = vrot.slane %v3056, %v3822
        %v3824 = vsel %vm3246, %v3823, %v3819
        %v3825 = vlaneseq
        %v3826 = vshrl.u32 %v3825, 7
        %v3827 = vsub.s32 %v3248, %v3826
        %v3828 = vrot.slane %v3059, %v3827
        %v3829 = vsel %vm3253, %v3828, %v3824
        %v3830 = vlaneseq
        %v3831 = vshrl.u32 %v3830, 7
        %v3832 = vsub.s32 %v3255, %v3831
        %v3833 = vrot.slane %v3062, %v3832
        %v3834 = vsel %vm3260, %v3833, %v3829
        %v3835 = vlaneseq
        %v3836 = vshrl.u32 %v3835, 7
        %v3837 = vsub.s32 %v3262, %v3836
        %v3838 = vrot.slane %v3065, %v3837
        %v3839 = vsel %vm3267, %v3838, %v3834
        %v3840 = vlaneseq
        %v3841 = vshrl.u32 %v3840, 7
        %v3842 = vsub.s32 %v3269, %v3841
        %v3843 = vrot.slane %v3068, %v3842
        %v3844 = vsel %vm3274, %v3843, %v3839
        %v3845 = vlaneseq
        %v3846 = vshrl.u32 %v3845, 7
        %v3847 = vsub.s32 %v3276, %v3846
        %v3848 = vrot.slane %v3071, %v3847
        %v3849 = vsel %vm3281, %v3848, %v3844
        %v3850 = vlaneseq
        %v3851 = vshrl.u32 %v3850, 7
        %v3852 = vsub.s32 %v3283, %v3851
        %v3853 = vrot.slane %v3074, %v3852
        %v3854 = vsel %vm3288, %v3853, %v3849
        %v3855 = vlaneseq
        %v3856 = vshrl.u32 %v3855, 7
        %v3857 = vsub.s32 %v3290, %v3856
        %v3858 = vrot.slane %v3077, %v3857
        %v3859 = vsel %vm3295, %v3858, %v3854
        %v3860 = vlaneseq
        %v3861 = vshrl.u32 %v3860, 7
        %v3862 = vsub.s32 %v3297, %v3861
        %v3863 = vrot.slane %v3080, %v3862
        %v3864 = vsel %vm3302, %v3863, %v3859
        %v3865 = vlaneseq
        %v3866 = vshrl.u32 %v3865, 7
        %v3867 = vsub.s32 %v3304, %v3866
        %v3868 = vrot.slane %v3083, %v3867
        %v3869 = vsel %vm3309, %v3868, %v3864
        %v3870 = vlaneseq
        %v3871 = vshrl.u32 %v3870, 7
        %v3872 = vsub.s32 %v3311, %v3871
        %v3873 = vrot.slane %v3086, %v3872
        %v3874 = vsel %vm3316, %v3873, %v3869
        %v3875 = vlaneseq
        %v3876 = vshrl.u32 %v3875, 7
        %v3877 = vsub.s32 %v3318, %v3876
        %v3878 = vrot.slane %v3089, %v3877
        %v3879 = vsel %vm3323, %v3878, %v3874
        %v3880 = vlaneseq
        %v3881 = vshrl.u32 %v3880, 7
        %v3882 = vsub.s32 %v3325, %v3881
        %v3883 = vrot.slane %v3092, %v3882
        %v3884 = vsel %vm3330, %v3883, %v3879
        %vm3885 = vcmask 1041409
        %v3886 = vsel %vm3885, %v3410, %v3331
        %vm3887 = vcmask 1042434
        %v3888 = vsel %vm3887, %v3489, %v3886
        %vm3889 = vcmask 1043459
        %v3890 = vsel %vm3889, %v3568, %v3888
        %vm3891 = vcmask 1044484
        %v3892 = vsel %vm3891, %v3647, %v3890
        %vm3893 = vcmask 1045509
        %v3894 = vsel %vm3893, %v3726, %v3892
        %vm3895 = vcmask 1046534
        %v3896 = vsel %vm3895, %v3805, %v3894
        %vm3897 = vcmask 1047559
        %v3898 = vsel %vm3897, %v3884, %v3896
        %3900 = vst [vmem:[%s150] sm:$0xff] %v3898
        %s3901 = sand.u32 %s68, 1
        %s3902 = scalar_lea.sflag [#allocation4], %s3901
        %s3903 = sand.u32 %s68, 1
        %s3904 = smul.addr %s3903, 8
        %s3905 = scalar_lea.vmem [#allocation5], %s3904
        // Predicated region
        $region29: #{tpu_custom_call.1} parent=23 // pred_check
          %p3906 = pneg %p78
        $region30: #{tpu_custom_call.1} parent=23 // pred_check_branch
          %3908 = sbr.rel (%p3906) target = $region32
        $region31: #{tpu_custom_call.1} parent=23 // pred_region
          %s3910 = ssub.s32 128, 128
          %3911 = vsyncadd %s3902, %s3910
          %s3912 = sadd.s32 %s23, %s22
          %s3913 = smul.addr %s3912, 128
          %s3914 = scalar_lea.hbm %s1, %s3913
          %s3916 = sshll.u32 %s3905, 4
          %s3917 = int_to_ptr.vmem [resolvable:$true] %s3916
          %3919 = dma.vmem_to_hbm [thread:$0]  %s3917, 128, %s3914, %s3902
        $region32: #{tpu_custom_call.1} parent=23 // pred_fallthru
          _
      $region24: #{tpu_custom_call.1} parent=5 // pred_fallthru
        _
      %p3920 = scmp.le.s32.totalorder 2, %s13
      // Predicated region
      $region33: #{tpu_custom_call.1} parent=5 // pred_check
        %p3921 = pneg %p3920
      $region34: #{tpu_custom_call.1} parent=5 // pred_check_branch
        %3923 = sbr.rel (%p3921) target = $region36
      $region35: #{tpu_custom_call.1} parent=5 // pred_region
        %s3924 = ssub.s32 %s13, 2
        // Predicated region
        $region37: #{tpu_custom_call.1} parent=35 // pred_check
          %p3925 = pneg %p84
        $region38: #{tpu_custom_call.1} parent=35 // pred_check_branch
          %3927 = sbr.rel (%p3925) target = $region40
        $region39: #{tpu_custom_call.1} parent=35 // pred_region
          %s3928 = sand.u32 %s69, 1
          %s3929 = scalar_lea.sflag [#allocation4], %s3928
          %s3930 = sand.u32 %s69, 1
          %s3931 = smul.addr %s3930, 8
          %s3932 = scalar_lea.vmem [#allocation5], %s3931
          %3933 = dma.done %s3929, 128
        $region40: #{tpu_custom_call.1} parent=35 // pred_fallthru
          _
      $region36: #{tpu_custom_call.1} parent=5 // pred_fallthru
        _
    $region6: #{tpu_custom_call.1} parent=1 // loop_footer
      %s17 = sadd.s32 1, %s13
    $region7: #{tpu_custom_call.1} parent=1 // loop_footer_branch
      %12 = sbr.rel target = $region3
    $region8: #{tpu_custom_call.1} parent=1 // loop_exit
      _
    %3934 = vsyncpa [#allocation3], 1
    %s3935 = scalar_lea.sflag [#allocation3], 1
    %3936 = vsyncpa %s3935, 1
    %3937 = vsyncpa [#allocation4], 1
    %s3938 = scalar_lea.sflag [#allocation4], 1
    %3939 = vsyncpa %s3938, 1

</llo_original>
